<compile_context>
chip_gen: v7x
topology: tpu7x:2x2x1
jax: 0.10.0
libtpu: 0.0.40
codegen_flags: <defaults>
</compile_context>

<pallas_src>
import jax
import jax.numpy as jnp
from jax import lax
from jax.experimental import pallas as pl
from jax.experimental.pallas import tpu as pltpu


def _round_up(v: int, m: int) -> int:
    return ((v + m - 1) // m) * m


def _gine_fused_kernel(eps_ref, ei_ref, ea_ref, x_ref, we_ref, be_ref,
                       w1_ref, b1_ref, bns_ref, bnb_ref, w2_ref, b2_ref,
                       out_ref, agg_ref):
    """Edge encoder + ReLU message + scatter-add, with the GIN MLP as epilogue.

    grid = (node_blocks, num_edge_tiles); axis 0 "parallel", axis 1 "arbitrary".
    agg_ref: VMEM scratch (block_n, D) f32 accumulator, resident per node block.
    """
    nb = pl.program_id(0)            # node block (parallel axis)
    ke = pl.program_id(1)            # edge tile (sequential reduction axis)

    block_n = agg_ref.shape[0]
    n_full = x_ref.shape[0]
    te = ei_ref.shape[1]

    @pl.when(ke == 0)
    def _():
        agg_ref[...] = jnp.zeros_like(agg_ref)

    ei = ei_ref[...]                 # (2, TE) int32, padded edges hold -1
    src = ei[0:1, :]                 # (1, TE)
    dst = ei[1:2, :]                 # (1, TE)

    # ---- gather x[src] via bf16 one-hot MXU matmul (full node range) ----
    gather_iota = lax.broadcasted_iota(jnp.int32, (n_full, te), 0)
    src_oh = (gather_iota == src).astype(jnp.bfloat16)        # (N, TE), exact 0/1
    x_bf = x_ref[...].astype(jnp.bfloat16)                    # (N, D)
    x_src = lax.dot_general(src_oh, x_bf, (((0,), (0,)), ((), ())),
                            preferred_element_type=jnp.float32)   # (TE, D)

    # ---- edge encoder: Linear(7 -> D), kept in f32 (tiny K=7 matmul) ----
    e = jnp.dot(ea_ref[...], we_ref[...],
                preferred_element_type=jnp.float32) + be_ref[...]  # (TE, D)

    # ---- ReLU message, bf16 for the scatter MXU call ----
    m = jnp.maximum(x_src + e, 0.0).astype(jnp.bfloat16)           # (TE, D)

    # ---- scatter-add into this node block's accumulator ----
    node_base = nb * block_n
    scatter_iota = lax.broadcasted_iota(jnp.int32, (block_n, te), 0) + node_base
    dst_oh = (scatter_iota == dst).astype(jnp.bfloat16)            # (BN, TE)
    agg_ref[...] += jnp.dot(dst_oh, m, preferred_element_type=jnp.float32)

    # ---- epilogue on the last edge tile: (1+eps)*x + agg, then the MLP ----
    @pl.when(ke == pl.num_programs(1) - 1)
    def _():
        if block_n == n_full:                       # static: single node block
            x_blk = x_ref[...].astype(jnp.float32)
        else:
            start = pl.multiple_of(node_base, block_n)
            x_blk = x_ref[pl.ds(start, block_n), :].astype(jnp.float32)
        h = (1.0 + eps_ref[0, 0]) * x_blk + agg_ref[...]
        z = jnp.dot(h.astype(jnp.bfloat16), w1_ref[...],
                    preferred_element_type=jnp.float32) + b1_ref[...]
        z = jnp.maximum(z * bns_ref[...] + bnb_ref[...], 0.0)      # folded BN + ReLU
        y = jnp.dot(z.astype(jnp.bfloat16), w2_ref[...],
                    preferred_element_type=jnp.float32) + b2_ref[...]
        out_ref[...] = y.astype(out_ref.dtype)


def gine_conv_custom(x, edge_index, edge_attr, params, *,
                     tile_e=256, node_blocks=1, bn_eps=1e-5):
    """JAX wrapper mirroring GINEConvCustom.forward(x, edge_index, edge_attr).

    x: (N, D), edge_index: (2, E) [src; dst], edge_attr: (E, 7).
    node_blocks > 1 splits the accumulator over a leading "parallel" grid axis
    (useful on v7x with 2 TensorCores); default 1 keeps a single resident block.
    """
    n, d = x.shape
    e_num, n_feat_e = edge_attr.shape
    d2 = params["w1"].shape[1]

    # ---- pad nodes / edges up to tile multiples ----
    n_pad = _round_up(max(n, 16), 16 * node_blocks)
    block_n = n_pad // node_blocks
    e_pad = _round_up(max(e_num, 8), tile_e)

    x_p = jnp.zeros((n_pad, d), jnp.float32).at[:n].set(x.astype(jnp.float32))
    ea_p = jnp.zeros((e_pad, n_feat_e), jnp.float32).at[:e_num].set(
        edge_attr.astype(jnp.float32))
    # lane-dense edge indices: (2, E_pad), padded edges = -1 -> zero one-hot column
    ei_p = jnp.full((2, e_pad), -1, jnp.int32).at[:, :e_num].set(
        edge_index.astype(jnp.int32))

    # ---- parameters (bf16 for MXU weight operands, f32 for biases/folded BN) ----
    we = params["we"].astype(jnp.float32)
    be = params["be"].astype(jnp.float32).reshape(1, d)
    w1 = params["w1"].astype(jnp.bfloat16)
    b1 = params["b1"].astype(jnp.float32).reshape(1, d2)
    w2 = params["w2"].astype(jnp.bfloat16)
    b2 = params["b2"].astype(jnp.float32).reshape(1, d)
    bn_scale = params["bn_gamma"] / jnp.sqrt(params["bn_var"] + bn_eps)
    bn_shift = params["bn_beta"] - params["bn_mean"] * bn_scale
    bn_scale = bn_scale.astype(jnp.float32).reshape(1, d2)
    bn_shift = bn_shift.astype(jnp.float32).reshape(1, d2)
    eps_arr = jnp.asarray(params["eps"], jnp.float32).reshape(1, 1)

    grid = (node_blocks, e_pad // tile_e)

    flops = (2 * n_pad * e_pad * d * node_blocks        # one-hot gather (dup/block)
             + 2 * e_pad * n_feat_e * d * node_blocks   # edge encoder (dup/block)
             + 2 * n_pad * e_pad * d                    # one-hot scatter
             + 4 * n_pad * d * d2)                      # MLP
    bytes_accessed = 4 * (2 * e_pad + e_pad * n_feat_e + 2 * n_pad * d
                          + n_feat_e * d + 2 * d * d2 + 4 * d2 + 2 * d)

    out = pl.pallas_call(
        _gine_fused_kernel,
        out_shape=jax.ShapeDtypeStruct((n_pad, d), x.dtype),
        grid_spec=pltpu.PrefetchScalarGridSpec(
            num_scalar_prefetch=0,
            grid=grid,
            in_specs=[
                pl.BlockSpec((1, 1), lambda i, k: (0, 0)),              # eps
                pl.BlockSpec((2, tile_e), lambda i, k: (0, k)),         # edge_index
                pl.BlockSpec((tile_e, n_feat_e), lambda i, k: (k, 0)),  # edge_attr
                pl.BlockSpec((n_pad, d), lambda i, k: (0, 0)),          # x (resident)
                pl.BlockSpec((n_feat_e, d), lambda i, k: (0, 0)),       # we
                pl.BlockSpec((1, d), lambda i, k: (0, 0)),              # be
                pl.BlockSpec((d, d2), lambda i, k: (0, 0)),             # w1 (bf16)
                pl.BlockSpec((1, d2), lambda i, k: (0, 0)),             # b1
                pl.BlockSpec((1, d2), lambda i, k: (0, 0)),             # bn scale
                pl.BlockSpec((1, d2), lambda i, k: (0, 0)),             # bn shift
                pl.BlockSpec((d2, d), lambda i, k: (0, 0)),             # w2 (bf16)
                pl.BlockSpec((1, d), lambda i, k: (0, 0)),              # b2
            ],
            out_specs=pl.BlockSpec((block_n, d), lambda i, k: (i, 0)),
            scratch_shapes=[pltpu.VMEM((block_n, d), jnp.float32)],     # agg
        ),
        compiler_params=pltpu.CompilerParams(
            dimension_semantics=("parallel", "arbitrary"),
            # footprint here is < 2 MiB; 32 MiB is safe on v5e/v6e/v7x.
            # Re-derive before scaling N or tile_e (v7x: 64 MiB physical VMEM).
            vmem_limit_bytes=32 * 1024 * 1024,
        ),
        cost_estimate=pl.CostEstimate(flops=flops, transcendentals=0,
                                      bytes_accessed=bytes_accessed),
    )(eps_arr, ei_p, ea_p, x_p, we, be, w1, b1, bn_scale, bn_shift, w2, b2)

    return out[:n]


def _reference(x, edge_index, edge_attr, params, bn_eps=1e-5):
    """Pure-JAX f32 reference of GINEConvCustom.forward (eval-mode BatchNorm)."""
    e = edge_attr @ params["we"] + params["be"]
    src, dst = edge_index[0], edge_index[1]
    m = jax.nn.relu(x[src] + e)
    agg = jnp.zeros_like(x).at[dst].add(m)
    h = (1.0 + params["eps"]) * x + agg
    z = h @ params["w1"] + params["b1"]
    z = params["bn_gamma"] * (z - params["bn_mean"]) / jnp.sqrt(params["bn_var"] + bn_eps) \
        + params["bn_beta"]
    z = jax.nn.relu(z)
    return z @ params["w2"] + params["b2"]


if __name__ == "__main__":
    key = jax.random.PRNGKey(0)
    ks = jax.random.split(key, 12)

    N, E, D = 64, 96, 32        # nodes, edges, emb_dim

    x = jax.random.normal(ks[0], (N, D), jnp.float32)
    edge_attr = jax.random.normal(ks[1], (E, 7), jnp.float32)
    src = jax.random.randint(ks[2], (E,), 0, N, dtype=jnp.int32)
    dst = jax.random.randint(ks[3], (E,), 0, N, dtype=jnp.int32)
    edge_index = jnp.stack([src, dst], axis=0)   # (2, E), PyG convention

    params = dict(
        we=0.2 * jax.random.normal(ks[4], (7, D), jnp.float32),
        be=0.1 * jax.random.normal(ks[5], (D,), jnp.float32),
        w1=0.2 * jax.random.normal(ks[6], (D, 2 * D), jnp.float32),
        b1=0.1 * jax.random.normal(ks[7], (2 * D,), jnp.float32),
        w2=0.2 * jax.random.normal(ks[8], (2 * D, D), jnp.float32),
        b2=0.1 * jax.random.normal(ks[9], (D,), jnp.float32),
        bn_gamma=1.0 + 0.1 * jax.random.normal(ks[10], (2 * D,), jnp.float32),
        bn_beta=0.1 * jax.random.normal(ks[11], (2 * D,), jnp.float32),
        bn_mean=jnp.zeros((2 * D,), jnp.float32),
        bn_var=jnp.ones((2 * D,), jnp.float32),
        eps=jnp.float32(0.0),    # train_eps=True initial value
    )

    out = gine_conv_custom(x, edge_index, edge_attr, params)
    out = jax.block_until_ready(out)

    ref = _reference(x, edge_index, edge_attr, params)
    assert out.shape == ref.shape, (out.shape, ref.shape)
    # bf16 MXU operands (one-hot gather/scatter, message, MLP weights) give
    # ~1e-2-level agreement vs the pure-f32 reference; tolerance loosened
    # accordingly (per the performance review).
    assert jnp.allclose(out, ref, atol=1e-1, rtol=5e-2), \
        float(jnp.max(jnp.abs(out - ref)))

    print("KERNEL_OK")
</pallas_src>

<mosaic_0001>
module attributes {stable_mosaic.version = 11 : i64} {
  func.func @_gine_fused_kernel(%arg0: i32, %arg1: i32, %arg2: memref<1x1xf32, #tpu.memory_space<vmem>>, %arg3: memref<2x256xi32, #tpu.memory_space<vmem>>, %arg4: memref<256x7xf32, #tpu.memory_space<vmem>>, %arg5: memref<64x32xf32, #tpu.memory_space<vmem>>, %arg6: memref<7x32xf32, #tpu.memory_space<vmem>>, %arg7: memref<1x32xf32, #tpu.memory_space<vmem>>, %arg8: memref<32x64xbf16, #tpu.memory_space<vmem>>, %arg9: memref<1x64xf32, #tpu.memory_space<vmem>>, %arg10: memref<1x64xf32, #tpu.memory_space<vmem>>, %arg11: memref<1x64xf32, #tpu.memory_space<vmem>>, %arg12: memref<64x32xbf16, #tpu.memory_space<vmem>>, %arg13: memref<1x32xf32, #tpu.memory_space<vmem>>, %arg14: memref<64x32xf32, #tpu.memory_space<vmem>>, %arg15: memref<64x32xf32, #tpu.memory_space<vmem>>) attributes {dimension_semantics = [#tpu.dimension_semantics<parallel>, #tpu.dimension_semantics<arbitrary>], iteration_bounds = array<i64: 1, 1>, scalar_prefetch = 0 : i64, scratch_operands = 1 : i64, tpu.core_type = #tpu.core_type<tc>, window_params = [{pipeline_mode = #tpu.pipeline_mode<synchronous>, transform_indices = @transform_0, window_bounds = array<i64: 1, 1>}, {transform_indices = @transform_1, window_bounds = array<i64: 2, 256>}, {transform_indices = @transform_2, window_bounds = array<i64: 256, 7>}, {pipeline_mode = #tpu.pipeline_mode<synchronous>, transform_indices = @transform_3, window_bounds = array<i64: 64, 32>}, {pipeline_mode = #tpu.pipeline_mode<synchronous>, transform_indices = @transform_4, window_bounds = array<i64: 7, 32>}, {pipeline_mode = #tpu.pipeline_mode<synchronous>, transform_indices = @transform_5, window_bounds = array<i64: 1, 32>}, {pipeline_mode = #tpu.pipeline_mode<synchronous>, transform_indices = @transform_6, window_bounds = array<i64: 32, 64>}, {pipeline_mode = #tpu.pipeline_mode<synchronous>, transform_indices = @transform_7, window_bounds = array<i64: 1, 64>}, {pipeline_mode = #tpu.pipeline_mode<synchronous>, transform_indices = @transform_8, window_bounds = array<i64: 1, 64>}, {pipeline_mode = #tpu.pipeline_mode<synchronous>, transform_indices = @transform_9, window_bounds = array<i64: 1, 64>}, {pipeline_mode = #tpu.pipeline_mode<synchronous>, transform_indices = @transform_10, window_bounds = array<i64: 64, 32>}, {pipeline_mode = #tpu.pipeline_mode<synchronous>, transform_indices = @transform_11, window_bounds = array<i64: 1, 32>}, {transform_indices = @transform_12, window_bounds = array<i64: 64, 32>}]} {
    %c0_i32 = arith.constant 0 : i32
    %0 = arith.cmpi eq, %arg1, %c0_i32 : i32
    %1 = arith.extui %0 : i1 to i32
    %c0_i32_0 = arith.constant 0 : i32
    %2 = arith.cmpi ne, %1, %c0_i32_0 : i32
    scf.if %2 {
      %cst_19 = arith.constant 0.000000e+00 : f32
      %41 = vector.broadcast %cst_19 : f32 to vector<64x32xf32>
      %c0_20 = arith.constant 0 : index
      %c0_21 = arith.constant 0 : index
      %42 = vector.load %arg15[%c0_20, %c0_21] : memref<64x32xf32, #tpu.memory_space<vmem>>, vector<64x32xf32>
      tpu.vector_store %arg15[%c0_20, %c0_21], %41 {strides = array<i32>} : memref<64x32xf32, #tpu.memory_space<vmem>>, vector<64x32xf32>,
    } else {
    }
    %c0 = arith.constant 0 : index
    %c0_1 = arith.constant 0 : index
    %3 = vector.load %arg3[%c0, %c0_1] : memref<2x256xi32, #tpu.memory_space<vmem>>, vector<2x256xi32>
    %4 = vector.extract_strided_slice %3 {offsets = [0, 0], sizes = [1, 256], strides = [1, 1]} : vector<2x256xi32> to vector<1x256xi32>
    %5 = vector.extract_strided_slice %3 {offsets = [1, 0], sizes = [1, 256], strides = [1, 1]} : vector<2x256xi32> to vector<1x256xi32>
    %6 = tpu.iota {dimensions = array<i32: 0>} : vector<64x256xi32>
    %7 = vector.broadcast %4 : vector<1x256xi32> to vector<64x256xi32>
    %8 = arith.cmpi eq, %6, %7 : vector<64x256xi32>
    %9 = arith.extui %8 : vector<64x256xi1> to vector<64x256xi32>
    %10 = arith.sitofp %9 : vector<64x256xi32> to vector<64x256xf32>
    %11 = arith.truncf %10 : vector<64x256xf32> to vector<64x256xbf16>
    %c0_2 = arith.constant 0 : index
    %c0_3 = arith.constant 0 : index
    %12 = vector.load %arg5[%c0_2, %c0_3] : memref<64x32xf32, #tpu.memory_space<vmem>>, vector<64x32xf32>
    %13 = arith.truncf %12 : vector<64x32xf32> to vector<64x32xbf16>
    %cst = arith.constant dense<0.000000e+00> : vector<256x32xf32>
    %14 = tpu.matmul %11, %13, %cst {dimension_numbers = #tpu.dot_dimension_numbers<[0], [0], [1], [1], [0, 1, 1, 1], [], []>} : vector<64x256xbf16>, vector<64x32xbf16>, vector<256x32xf32> -> vector<256x32xf32>
    %c0_4 = arith.constant 0 : index
    %c0_5 = arith.constant 0 : index
    %15 = vector.load %arg4[%c0_4, %c0_5] : memref<256x7xf32, #tpu.memory_space<vmem>>, vector<256x7xf32>
    %c0_6 = arith.constant 0 : index
    %c0_7 = arith.constant 0 : index
    %16 = vector.load %arg6[%c0_6, %c0_7] : memref<7x32xf32, #tpu.memory_space<vmem>>, vector<7x32xf32>
    %cst_8 = arith.constant dense<0.000000e+00> : vector<256x32xf32>
    %17 = tpu.matmul %15, %16, %cst_8 {dimension_numbers = #tpu.dot_dimension_numbers<[1], [0], [0], [1], [0, 0, 1, 1], [], []>} : vector<256x7xf32>, vector<7x32xf32>, vector<256x32xf32> -> vector<256x32xf32>
    %c0_9 = arith.constant 0 : index
    %c0_10 = arith.constant 0 : index
    %18 = vector.load %arg7[%c0_9, %c0_10] : memref<1x32xf32, #tpu.memory_space<vmem>>, vector<1x32xf32>
    %19 = vector.broadcast %18 : vector<1x32xf32> to vector<256x32xf32>
    %20 = arith.addf %17, %19 : vector<256x32xf32>
    %21 = arith.addf %14, %20 : vector<256x32xf32>
    %cst_11 = arith.constant 0.000000e+00 : f32
    %22 = vector.broadcast %cst_11 : f32 to vector<256x32xf32>
    %23 = arith.maximumf %21, %22 : vector<256x32xf32>
    %24 = arith.truncf %23 : vector<256x32xf32> to vector<256x32xbf16>
    %c64_i32 = arith.constant 64 : i32
    %25 = arith.muli %arg0, %c64_i32 : i32
    %26 = tpu.iota {dimensions = array<i32: 0>} : vector<64x256xi32>
    %27 = vector.broadcast %25 : i32 to vector<64x256xi32>
    %28 = arith.addi %26, %27 : vector<64x256xi32>
    %29 = vector.broadcast %5 : vector<1x256xi32> to vector<64x256xi32>
    %30 = arith.cmpi eq, %28, %29 : vector<64x256xi32>
    %31 = arith.extui %30 : vector<64x256xi1> to vector<64x256xi32>
    %32 = arith.sitofp %31 : vector<64x256xi32> to vector<64x256xf32>
    %33 = arith.truncf %32 : vector<64x256xf32> to vector<64x256xbf16>
    %c0_12 = arith.constant 0 : index
    %c0_13 = arith.constant 0 : index
    %34 = vector.load %arg15[%c0_12, %c0_13] : memref<64x32xf32, #tpu.memory_space<vmem>>, vector<64x32xf32>
    %cst_14 = arith.constant dense<0.000000e+00> : vector<64x32xf32>
    %35 = tpu.matmul %33, %24, %cst_14 {dimension_numbers = #tpu.dot_dimension_numbers<[1], [0], [0], [1], [0, 0, 1, 1], [], []>} : vector<64x256xbf16>, vector<256x32xbf16>, vector<64x32xf32> -> vector<64x32xf32>
    %36 = arith.addf %34, %35 : vector<64x32xf32>
    %c0_15 = arith.constant 0 : index
    %c0_16 = arith.constant 0 : index
    %37 = vector.load %arg15[%c0_15, %c0_16] : memref<64x32xf32, #tpu.memory_space<vmem>>, vector<64x32xf32>
    tpu.vector_store %arg15[%c0_15, %c0_16], %36 {strides = array<i32>} : memref<64x32xf32, #tpu.memory_space<vmem>>, vector<64x32xf32>,
    %c0_i32_17 = arith.constant 0 : i32
    %38 = arith.cmpi eq, %arg1, %c0_i32_17 : i32
    %39 = arith.extui %38 : i1 to i32
    %c0_i32_18 = arith.constant 0 : i32
    %40 = arith.cmpi ne, %39, %c0_i32_18 : i32
    scf.if %40 {
      %c0_19 = arith.constant 0 : index
      %c0_20 = arith.constant 0 : index
      %41 = vector.load %arg5[%c0_19, %c0_20] : memref<64x32xf32, #tpu.memory_space<vmem>>, vector<64x32xf32>
      %c0_21 = arith.constant 0 : index
      %c0_22 = arith.constant 0 : index
      %42 = vector.load %arg2[%c0_21, %c0_22] : memref<1x1xf32, #tpu.memory_space<vmem>>, vector<1x1xf32>
      %43 = vector.extract %42[0, 0] : f32 from vector<1x1xf32>
      %cst_23 = arith.constant 1.000000e+00 : f32
      %44 = arith.addf %cst_23, %43 : f32
      %45 = vector.broadcast %44 : f32 to vector<64x32xf32>
      %46 = arith.mulf %45, %41 : vector<64x32xf32>
      %c0_24 = arith.constant 0 : index
      %c0_25 = arith.constant 0 : index
      %47 = vector.load %arg15[%c0_24, %c0_25] : memref<64x32xf32, #tpu.memory_space<vmem>>, vector<64x32xf32>
      %48 = arith.addf %46, %47 : vector<64x32xf32>
      %49 = arith.truncf %48 : vector<64x32xf32> to vector<64x32xbf16>
      %c0_26 = arith.constant 0 : index
      %c0_27 = arith.constant 0 : index
      %50 = vector.load %arg8[%c0_26, %c0_27] : memref<32x64xbf16, #tpu.memory_space<vmem>>, vector<32x64xbf16>
      %cst_28 = arith.constant dense<0.000000e+00> : vector<64x64xf32>
      %51 = tpu.matmul %49, %50, %cst_28 {dimension_numbers = #tpu.dot_dimension_numbers<[1], [0], [0], [1], [0, 0, 1, 1], [], []>} : vector<64x32xbf16>, vector<32x64xbf16>, vector<64x64xf32> -> vector<64x64xf32>
      %c0_29 = arith.constant 0 : index
      %c0_30 = arith.constant 0 : index
      %52 = vector.load %arg9[%c0_29, %c0_30] : memref<1x64xf32, #tpu.memory_space<vmem>>, vector<1x64xf32>
      %53 = vector.broadcast %52 : vector<1x64xf32> to vector<64x64xf32>
      %54 = arith.addf %51, %53 : vector<64x64xf32>
      %c0_31 = arith.constant 0 : index
      %c0_32 = arith.constant 0 : index
      %55 = vector.load %arg10[%c0_31, %c0_32] : memref<1x64xf32, #tpu.memory_space<vmem>>, vector<1x64xf32>
      %56 = vector.broadcast %55 : vector<1x64xf32> to vector<64x64xf32>
      %57 = arith.mulf %54, %56 : vector<64x64xf32>
      %c0_33 = arith.constant 0 : index
      %c0_34 = arith.constant 0 : index
      %58 = vector.load %arg11[%c0_33, %c0_34] : memref<1x64xf32, #tpu.memory_space<vmem>>, vector<1x64xf32>
      %59 = vector.broadcast %58 : vector<1x64xf32> to vector<64x64xf32>
      %60 = arith.addf %57, %59 : vector<64x64xf32>
      %cst_35 = arith.constant 0.000000e+00 : f32
      %61 = vector.broadcast %cst_35 : f32 to vector<64x64xf32>
      %62 = arith.maximumf %60, %61 : vector<64x64xf32>
      %63 = arith.truncf %62 : vector<64x64xf32> to vector<64x64xbf16>
      %c0_36 = arith.constant 0 : index
      %c0_37 = arith.constant 0 : index
      %64 = vector.load %arg12[%c0_36, %c0_37] : memref<64x32xbf16, #tpu.memory_space<vmem>>, vector<64x32xbf16>
      %cst_38 = arith.constant dense<0.000000e+00> : vector<64x32xf32>
      %65 = tpu.matmul %63, %64, %cst_38 {dimension_numbers = #tpu.dot_dimension_numbers<[1], [0], [0], [1], [0, 0, 1, 1], [], []>} : vector<64x64xbf16>, vector<64x32xbf16>, vector<64x32xf32> -> vector<64x32xf32>
      %c0_39 = arith.constant 0 : index
      %c0_40 = arith.constant 0 : index
      %66 = vector.load %arg13[%c0_39, %c0_40] : memref<1x32xf32, #tpu.memory_space<vmem>>, vector<1x32xf32>
      %67 = vector.broadcast %66 : vector<1x32xf32> to vector<64x32xf32>
      %68 = arith.addf %65, %67 : vector<64x32xf32>
      %c0_41 = arith.constant 0 : index
      %c0_42 = arith.constant 0 : index
      %69 = vector.load %arg14[%c0_41, %c0_42] : memref<64x32xf32, #tpu.memory_space<vmem>>, vector<64x32xf32>
      tpu.vector_store %arg14[%c0_41, %c0_42], %68 {strides = array<i32>} : memref<64x32xf32, #tpu.memory_space<vmem>>, vector<64x32xf32>,
    } else {
    }
    return
  }
  func.func @transform_0(%arg0: i32, %arg1: i32) -> (i32, i32) {
    %c0_i32 = arith.constant 0 : i32
    %c0_i32_0 = arith.constant 0 : i32
    %c0_i32_1 = arith.constant 0 : i32
    return %c0_i32, %c0_i32_0 : i32, i32
  }
  func.func @transform_1(%arg0: i32, %arg1: i32) -> (i32, i32) {
    %c0_i32 = arith.constant 0 : i32
    %c0_i32_0 = arith.constant 0 : i32
    return %c0_i32, %arg1 : i32, i32
  }
  func.func @transform_2(%arg0: i32, %arg1: i32) -> (i32, i32) {
    %c0_i32 = arith.constant 0 : i32
    %c0_i32_0 = arith.constant 0 : i32
    return %arg1, %c0_i32 : i32, i32
  }
  func.func @transform_3(%arg0: i32, %arg1: i32) -> (i32, i32) {
    %c0_i32 = arith.constant 0 : i32
    %c0_i32_0 = arith.constant 0 : i32
    %c0_i32_1 = arith.constant 0 : i32
    return %c0_i32, %c0_i32_0 : i32, i32
  }
  func.func @transform_4(%arg0: i32, %arg1: i32) -> (i32, i32) {
    %c0_i32 = arith.constant 0 : i32
    %c0_i32_0 = arith.constant 0 : i32
    %c0_i32_1 = arith.constant 0 : i32
    return %c0_i32, %c0_i32_0 : i32, i32
  }
  func.func @transform_5(%arg0: i32, %arg1: i32) -> (i32, i32) {
    %c0_i32 = arith.constant 0 : i32
    %c0_i32_0 = arith.constant 0 : i32
    %c0_i32_1 = arith.constant 0 : i32
    return %c0_i32, %c0_i32_0 : i32, i32
  }
  func.func @transform_6(%arg0: i32, %arg1: i32) -> (i32, i32) {
    %c0_i32 = arith.constant 0 : i32
    %c0_i32_0 = arith.constant 0 : i32
    %c0_i32_1 = arith.constant 0 : i32
    return %c0_i32, %c0_i32_0 : i32, i32
  }
  func.func @transform_7(%arg0: i32, %arg1: i32) -> (i32, i32) {
    %c0_i32 = arith.constant 0 : i32
    %c0_i32_0 = arith.constant 0 : i32
    %c0_i32_1 = arith.constant 0 : i32
    return %c0_i32, %c0_i32_0 : i32, i32
  }
  func.func @transform_8(%arg0: i32, %arg1: i32) -> (i32, i32) {
    %c0_i32 = arith.constant 0 : i32
    %c0_i32_0 = arith.constant 0 : i32
    %c0_i32_1 = arith.constant 0 : i32
    return %c0_i32, %c0_i32_0 : i32, i32
  }
  func.func @transform_9(%arg0: i32, %arg1: i32) -> (i32, i32) {
    %c0_i32 = arith.constant 0 : i32
    %c0_i32_0 = arith.constant 0 : i32
    %c0_i32_1 = arith.constant 0 : i32
    return %c0_i32, %c0_i32_0 : i32, i32
  }
  func.func @transform_10(%arg0: i32, %arg1: i32) -> (i32, i32) {
    %c0_i32 = arith.constant 0 : i32
    %c0_i32_0 = arith.constant 0 : i32
    %c0_i32_1 = arith.constant 0 : i32
    return %c0_i32, %c0_i32_0 : i32, i32
  }
  func.func @transform_11(%arg0: i32, %arg1: i32) -> (i32, i32) {
    %c0_i32 = arith.constant 0 : i32
    %c0_i32_0 = arith.constant 0 : i32
    %c0_i32_1 = arith.constant 0 : i32
    return %c0_i32, %c0_i32_0 : i32, i32
  }
  func.func @transform_12(%arg0: i32, %arg1: i32) -> (i32, i32) {
    %c0_i32 = arith.constant 0 : i32
    %c0_i32_0 = arith.constant 0 : i32
    return %arg0, %c0_i32 : i32, i32
  }
}

</mosaic_0001>

<llo_original>
// kernel: tpu_custom_call.1
$region0: #{tpu_custom_call.1}
  #allocation0 [shape = 'u32[]', space=smem, size = 0x4, offset = 0x4, fixed_abs, tag = 'smem constant byte address 0x4 - core index']
  #allocation1 [shape = 'u32[144,128]{1,0:T(1,128)}', space=vmem, size = 0x12000, scoped, tag = 'internal scratch']
  #allocation2 [shape = 'f32[64,32]{1,0:T(8,128)}', space=vmem, size = 0x8000, scoped, tag = 'scratch operand']
  #allocation3 [shape = 'f32[1,1]{1,0:T(1,128)S(1)}', space=vmem, size = 0x200, scoped, tag = 'scoped memory for tpu_custom_call.1']
  %s0 = inlined_call_operand.<no memory space> [shape: f32[1,1], index: 0, kind: input, shape index: {}]
  %s1 = inlined_call_operand.vmem [shape: s32[2,256], index: 1, kind: input, shape index: {}]
  %s2 = inlined_call_operand.vmem [shape: f32[256,7], index: 2, kind: input, shape index: {}]
  %s3 = inlined_call_operand.vmem [shape: f32[64,32], index: 3, kind: input, shape index: {}]
  %s4 = inlined_call_operand.vmem [shape: f32[7,32], index: 4, kind: input, shape index: {}]
  %s5 = inlined_call_operand.vmem [shape: f32[1,32], index: 5, kind: input, shape index: {}]
  %s6 = inlined_call_operand.vmem [shape: bf16[32,64], index: 6, kind: input, shape index: {}]
  %s7 = inlined_call_operand.vmem [shape: f32[1,64], index: 7, kind: input, shape index: {}]
  %s8 = inlined_call_operand.vmem [shape: f32[1,64], index: 8, kind: input, shape index: {}]
  %s9 = inlined_call_operand.vmem [shape: f32[1,64], index: 9, kind: input, shape index: {}]
  %s10 = inlined_call_operand.vmem [shape: bf16[64,32], index: 10, kind: input, shape index: {}]
  %s11 = inlined_call_operand.vmem [shape: f32[1,32], index: 11, kind: input, shape index: {}]
  %s12 = inlined_call_operand.vmem [shape: f32[64,32], index: 12, kind: output, shape index: {}]
  %s13 = sld [smem:[#allocation0]]
  $region66: #{tpu_custom_call.1} parent=0
    _
  %s15 = ssub.s32 1, %s13
  %s16 = scalar_select 0, %s15, %s13
  %v17 = vstv %s0
  %18 = vst [vmem:[#allocation3] sm:$0x1] %v17
  // Predicated region
  $region2: #{tpu_custom_call.1} parent=0 // pred_check
    _
  $region3: #{tpu_custom_call.1} parent=0 // pred_check_branch
    %20 = sbr.rel (0) target = $region5
  $region4: #{tpu_custom_call.1} parent=0 // pred_region
    _
  $region5: #{tpu_custom_call.1} parent=0 // pred_fallthru
    _
  // Predicated region
  $region6: #{tpu_custom_call.1} parent=0 // pred_check
    _
  $region7: #{tpu_custom_call.1} parent=0 // pred_check_branch
    %22 = sbr.rel (0) target = $region9
  $region8: #{tpu_custom_call.1} parent=0 // pred_region
    _
  $region9: #{tpu_custom_call.1} parent=0 // pred_fallthru
    _
  // Predicated region
  $region10: #{tpu_custom_call.1} parent=0 // pred_check
    _
  $region11: #{tpu_custom_call.1} parent=0 // pred_check_branch
    %24 = sbr.rel (0) target = $region13
  $region12: #{tpu_custom_call.1} parent=0 // pred_region
    _
  $region13: #{tpu_custom_call.1} parent=0 // pred_fallthru
    _
  // Predicated region
  $region14: #{tpu_custom_call.1} parent=0 // pred_check
    _
  $region15: #{tpu_custom_call.1} parent=0 // pred_check_branch
    %26 = sbr.rel (0) target = $region17
  $region16: #{tpu_custom_call.1} parent=0 // pred_region
    _
  $region17: #{tpu_custom_call.1} parent=0 // pred_fallthru
    _
  // Predicated region
  $region18: #{tpu_custom_call.1} parent=0 // pred_check
    _
  $region19: #{tpu_custom_call.1} parent=0 // pred_check_branch
    %28 = sbr.rel (0) target = $region21
  $region20: #{tpu_custom_call.1} parent=0 // pred_region
    _
  $region21: #{tpu_custom_call.1} parent=0 // pred_fallthru
    _
  // Predicated region
  $region22: #{tpu_custom_call.1} parent=0 // pred_check
    _
  $region23: #{tpu_custom_call.1} parent=0 // pred_check_branch
    %30 = sbr.rel (0) target = $region25
  $region24: #{tpu_custom_call.1} parent=0 // pred_region
    _
  $region25: #{tpu_custom_call.1} parent=0 // pred_fallthru
    _
  // Predicated region
  $region26: #{tpu_custom_call.1} parent=0 // pred_check
    _
  $region27: #{tpu_custom_call.1} parent=0 // pred_check_branch
    %32 = sbr.rel (0) target = $region29
  $region28: #{tpu_custom_call.1} parent=0 // pred_region
    _
  $region29: #{tpu_custom_call.1} parent=0 // pred_fallthru
    _
  // Predicated region
  $region30: #{tpu_custom_call.1} parent=0 // pred_check
    _
  $region31: #{tpu_custom_call.1} parent=0 // pred_check_branch
    %34 = sbr.rel (0) target = $region33
  $region32: #{tpu_custom_call.1} parent=0 // pred_region
    _
  $region33: #{tpu_custom_call.1} parent=0 // pred_fallthru
    _
  // Predicated region
  $region34: #{tpu_custom_call.1} parent=0 // pred_check
    _
  $region35: #{tpu_custom_call.1} parent=0 // pred_check_branch
    %36 = sbr.rel (0) target = $region37
  $region36: #{tpu_custom_call.1} parent=0 // pred_region
    _
  $region37: #{tpu_custom_call.1} parent=0 // pred_fallthru
    _
  // Predicated region
  $region38: #{tpu_custom_call.1} parent=0 // pred_check
    _
  $region39: #{tpu_custom_call.1} parent=0 // pred_check_branch
    %38 = sbr.rel (0) target = $region41
  $region40: #{tpu_custom_call.1} parent=0 // pred_region
    _
  $region41: #{tpu_custom_call.1} parent=0 // pred_fallthru
    _
  // Predicated region
  $region42: #{tpu_custom_call.1} parent=0 // pred_check
    _
  $region43: #{tpu_custom_call.1} parent=0 // pred_check_branch
    %40 = sbr.rel (0) target = $region45
  $region44: #{tpu_custom_call.1} parent=0 // pred_region
    _
  $region45: #{tpu_custom_call.1} parent=0 // pred_fallthru
    _
  // Predicated region
  $region46: #{tpu_custom_call.1} parent=0 // pred_check
    _
  $region47: #{tpu_custom_call.1} parent=0 // pred_check_branch
    %42 = sbr.rel (0) target = $region49
  $region48: #{tpu_custom_call.1} parent=0 // pred_region
    _
  $region49: #{tpu_custom_call.1} parent=0 // pred_fallthru
    _
  %p44 = scmp.eq.s32.totalorder 0, 0
  // Predicated region
  $region50: #{tpu_custom_call.1} parent=0 // pred_check
    %p45 = pneg %p44
  $region51: #{tpu_custom_call.1} parent=0 // pred_check_branch
    %47 = sbr.rel (%p45) target = $region53
  $region52: #{tpu_custom_call.1} parent=0 // pred_region
    %vm48 = vcmask 261120
    %49 = vst.msk [vmem:[#allocation2] sm:$0xff] %vm48, 0.0
    %50 = vst.msk [vmem:[#allocation2 + $0x8] sm:$0xff] %vm48, 0.0
    %51 = vst.msk [vmem:[#allocation2 + $0x10] sm:$0xff] %vm48, 0.0
    %52 = vst.msk [vmem:[#allocation2 + $0x18] sm:$0xff] %vm48, 0.0
    %53 = vst.msk [vmem:[#allocation2 + $0x20] sm:$0xff] %vm48, 0.0
    %54 = vst.msk [vmem:[#allocation2 + $0x28] sm:$0xff] %vm48, 0.0
    %55 = vst.msk [vmem:[#allocation2 + $0x30] sm:$0xff] %vm48, 0.0
    %56 = vst.msk [vmem:[#allocation2 + $0x38] sm:$0xff] %vm48, 0.0
  $region53: #{tpu_custom_call.1} parent=0 // pred_fallthru
    _
  %v57 = vld [vmem:[%s1] sm:$0xf]
  %v58 = vlaneseq
  %v59 = vshrl.u32 %v58, 7
  %v60 = vadd.s32 %v59, 8
  %v61 = vadd.s32 %v59, 16
  %v62 = vadd.s32 %v59, 24
  %v63 = vadd.s32 %v59, 32
  %v64 = vadd.s32 %v59, 40
  %v65 = vadd.s32 %v59, 48
  %v66 = vadd.s32 %v59, 56
  %v67 = vlaneseq
  %v68 = vshrl.u32 %v67, 7
  %v69 = vsub.s32 0, %v68
  %v70 = vrot.slane %v57, %v69
  %v71 = vlaneseq
  %v72 = vshrl.u32 %v71, 7
  %v73 = vsub.s32 2, %v72
  %v74 = vrot.slane %v57, %v73
  %v75 = vlaneseq
  %v76 = vshrl.u32 %v75, 7
  %v77 = vsub.s32 0, %v76
  %v78 = vrot.slane %v70, %v77
  %v79 = vlaneseq
  %v80 = vshrl.u32 %v79, 7
  %v81 = vsub.s32 0, %v80
  %v82 = vrot.slane %v74, %v81
  %vm83 = vcmp.eq.s32.totalorder %v59, %v78
  %vm84 = vcmp.eq.s32.totalorder %v59, %v82
  %vm85 = vcmp.eq.s32.totalorder %v60, %v78
  %vm86 = vcmp.eq.s32.totalorder %v60, %v82
  %vm87 = vcmp.eq.s32.totalorder %v61, %v78
  %vm88 = vcmp.eq.s32.totalorder %v61, %v82
  %vm89 = vcmp.eq.s32.totalorder %v62, %v78
  %vm90 = vcmp.eq.s32.totalorder %v62, %v82
  %vm91 = vcmp.eq.s32.totalorder %v63, %v78
  %vm92 = vcmp.eq.s32.totalorder %v63, %v82
  %vm93 = vcmp.eq.s32.totalorder %v64, %v78
  %vm94 = vcmp.eq.s32.totalorder %v64, %v82
  %vm95 = vcmp.eq.s32.totalorder %v65, %v78
  %vm96 = vcmp.eq.s32.totalorder %v65, %v82
  %vm97 = vcmp.eq.s32.totalorder %v66, %v78
  %vm98 = vcmp.eq.s32.totalorder %v66, %v82
  %v99 = vsel %vm83, 1, 0
  %v100 = vsel %vm84, 1, 0
  %v101 = vsel %vm85, 1, 0
  %v102 = vsel %vm86, 1, 0
  %v103 = vsel %vm87, 1, 0
  %v104 = vsel %vm88, 1, 0
  %v105 = vsel %vm89, 1, 0
  %v106 = vsel %vm90, 1, 0
  %v107 = vsel %vm91, 1, 0
  %v108 = vsel %vm92, 1, 0
  %v109 = vsel %vm93, 1, 0
  %v110 = vsel %vm94, 1, 0
  %v111 = vsel %vm95, 1, 0
  %v112 = vsel %vm96, 1, 0
  %v113 = vsel %vm97, 1, 0
  %v114 = vsel %vm98, 1, 0
  %v115 = vcvt.s32.f32 %v99
  %v116 = vcvt.s32.f32 %v100
  %v117 = vcvt.s32.f32 %v101
  %v118 = vcvt.s32.f32 %v102
  %v119 = vcvt.s32.f32 %v103
  %v120 = vcvt.s32.f32 %v104
  %v121 = vcvt.s32.f32 %v105
  %v122 = vcvt.s32.f32 %v106
  %v123 = vcvt.s32.f32 %v107
  %v124 = vcvt.s32.f32 %v108
  %v125 = vcvt.s32.f32 %v109
  %v126 = vcvt.s32.f32 %v110
  %v127 = vcvt.s32.f32 %v111
  %v128 = vcvt.s32.f32 %v112
  %v129 = vcvt.s32.f32 %v113
  %v130 = vcvt.s32.f32 %v114
  %v131 = vpack.c.bf16 %v117, %v115
  %v132 = vpack.c.bf16 %v118, %v116
  %v133 = vpack.c.bf16 %v121, %v119
  %v134 = vpack.c.bf16 %v122, %v120
  %v135 = vpack.c.bf16 %v125, %v123
  %v136 = vpack.c.bf16 %v126, %v124
  %v137 = vpack.c.bf16 %v129, %v127
  %v138 = vpack.c.bf16 %v130, %v128
  %v139 = vld [vmem:[%s3] sm:$0xff]
  %v140 = vld [vmem:[%s3 + $0x8] sm:$0xff]
  %v141 = vld [vmem:[%s3 + $0x10] sm:$0xff]
  %v142 = vld [vmem:[%s3 + $0x18] sm:$0xff]
  %v143 = vld [vmem:[%s3 + $0x20] sm:$0xff]
  %v144 = vld [vmem:[%s3 + $0x28] sm:$0xff]
  %v145 = vld [vmem:[%s3 + $0x30] sm:$0xff]
  %v146 = vld [vmem:[%s3 + $0x38] sm:$0xff]
  %v147 = vpack.c.bf16 %v140, %v139
  %v148 = vpack.c.bf16 %v142, %v141
  %v149 = vpack.c.bf16 %v144, %v143
  %v150 = vpack.c.bf16 %v146, %v145
  %v151 = vld [vmem:[%s2] sm:$0xff]
  %v152 = vld [vmem:[%s2 + $0x8] sm:$0xff]
  %v153 = vld [vmem:[%s2 + $0x10] sm:$0xff]
  %v154 = vld [vmem:[%s2 + $0x18] sm:$0xff]
  %v155 = vld [vmem:[%s2 + $0x20] sm:$0xff]
  %v156 = vld [vmem:[%s2 + $0x28] sm:$0xff]
  %v157 = vld [vmem:[%s2 + $0x30] sm:$0xff]
  %v158 = vld [vmem:[%s2 + $0x38] sm:$0xff]
  %v159 = vld [vmem:[%s2 + $0x40] sm:$0xff]
  %v160 = vld [vmem:[%s2 + $0x48] sm:$0xff]
  %v161 = vld [vmem:[%s2 + $0x50] sm:$0xff]
  %v162 = vld [vmem:[%s2 + $0x58] sm:$0xff]
  %v163 = vld [vmem:[%s2 + $0x60] sm:$0xff]
  %v164 = vld [vmem:[%s2 + $0x68] sm:$0xff]
  %v165 = vld [vmem:[%s2 + $0x70] sm:$0xff]
  %v166 = vld [vmem:[%s2 + $0x78] sm:$0xff]
  %v167 = vld [vmem:[%s2 + $0x80] sm:$0xff]
  %v168 = vld [vmem:[%s2 + $0x88] sm:$0xff]
  %v169 = vld [vmem:[%s2 + $0x90] sm:$0xff]
  %v170 = vld [vmem:[%s2 + $0x98] sm:$0xff]
  %v171 = vld [vmem:[%s2 + $0xa0] sm:$0xff]
  %v172 = vld [vmem:[%s2 + $0xa8] sm:$0xff]
  %v173 = vld [vmem:[%s2 + $0xb0] sm:$0xff]
  %v174 = vld [vmem:[%s2 + $0xb8] sm:$0xff]
  %v175 = vld [vmem:[%s2 + $0xc0] sm:$0xff]
  %v176 = vld [vmem:[%s2 + $0xc8] sm:$0xff]
  %v177 = vld [vmem:[%s2 + $0xd0] sm:$0xff]
  %v178 = vld [vmem:[%s2 + $0xd8] sm:$0xff]
  %v179 = vld [vmem:[%s2 + $0xe0] sm:$0xff]
  %v180 = vld [vmem:[%s2 + $0xe8] sm:$0xff]
  %v181 = vld [vmem:[%s2 + $0xf0] sm:$0xff]
  %v182 = vld [vmem:[%s2 + $0xf8] sm:$0xff]
  %v183 = vld [vmem:[%s4] sm:$0x7f]
  %v184 = vld [vmem:[%s5] sm:$0x1]
  %v186 = vlaneseq
  %v187 = vshrl.u32 %v186, 7
  %v188 = vsub.s32 0, %v187
  %v189 = vrot.slane %v184, %v188
  %vm191 = vcmask 56320
  %v193 = vsel %vm191, %v151, 0
  %v196 = vsel %vm191, %v152, 0
  %v199 = vsel %vm191, %v153, 0
  %v202 = vsel %vm191, %v154, 0
  %v205 = vsel %vm191, %v155, 0
  %v208 = vsel %vm191, %v156, 0
  %v211 = vsel %vm191, %v157, 0
  %v214 = vsel %vm191, %v158, 0
  %v217 = vsel %vm191, %v159, 0
  %v220 = vsel %vm191, %v160, 0
  %v223 = vsel %vm191, %v161, 0
  %v226 = vsel %vm191, %v162, 0
  %v229 = vsel %vm191, %v163, 0
  %v232 = vsel %vm191, %v164, 0
  %v235 = vsel %vm191, %v165, 0
  %v238 = vsel %vm191, %v166, 0
  %v241 = vsel %vm191, %v167, 0
  %v244 = vsel %vm191, %v168, 0
  %v247 = vsel %vm191, %v169, 0
  %v250 = vsel %vm191, %v170, 0
  %v253 = vsel %vm191, %v171, 0
  %v256 = vsel %vm191, %v172, 0
  %v259 = vsel %vm191, %v173, 0
  %v262 = vsel %vm191, %v174, 0
  %v265 = vsel %vm191, %v175, 0
  %v268 = vsel %vm191, %v176, 0
  %v271 = vsel %vm191, %v177, 0
  %v274 = vsel %vm191, %v178, 0
  %v277 = vsel %vm191, %v179, 0
  %v280 = vsel %vm191, %v180, 0
  %v283 = vsel %vm191, %v181, 0
  %v286 = vsel %vm191, %v182, 0
  %vm288 = vcmask 1046528
  %v290 = vsel %vm288, %v183, 0
  %292 = vmatprep.subr.mxu0 0.0
  %293 = vmatpush1.msra.mxu0 %v290
  %294 = vmatprep.subr.mxu0 0.0
  %295 = vmatpush1.msra.mxu0 0.0
  %296 = vmatprep.subr.mxu0 0.0
  %297 = vmatpush1.msra.mxu0 0.0
  %298 = vmatprep.subr.mxu0 0.0
  %299 = vmatpush1.msra.mxu0 0.0
  %300 = vmatprep.subr.mxu0 0.0
  %301 = vmatpush1.msra.mxu0 0.0
  %302 = vmatprep.subr.mxu0 0.0
  %303 = vmatpush1.msra.mxu0 0.0
  %304 = vmatprep.subr.mxu0 0.0
  %305 = vmatpush1.msra.mxu0 0.0
  %306 = vmatprep.subr.mxu0 0.0
  %307 = vmatpush1.msra.mxu0 0.0
  %308 = vmatprep.subr.mxu0 0.0
  %309 = vmatpush1.msra.mxu0 0.0
  %310 = vmatprep.subr.mxu0 0.0
  %311 = vmatpush1.msra.mxu0 0.0
  %312 = vmatprep.subr.mxu0 0.0
  %313 = vmatpush1.msra.mxu0 0.0
  %314 = vmatprep.subr.mxu0 0.0
  %315 = vmatpush1.msra.mxu0 0.0
  %316 = vmatprep.subr.mxu0 0.0
  %317 = vmatpush1.msra.mxu0 0.0
  %318 = vmatprep.subr.mxu0 0.0
  %319 = vmatpush1.msra.mxu0 0.0
  %320 = vmatprep.subr.mxu0 0.0
  %321 = vmatpush1.msra.mxu0 0.0
  %322 = vmatprep.subr.mxu0 0.0
  %323 = vmatpush1.msra.mxu0 0.0
  %324 = vmatprep.subr.mxu0 0.0
  %325 = vmatpush1.msra.mxu0 0.0
  %326 = vmatprep.subr.mxu0 0.0
  %327 = vmatpush1.msra.mxu0 0.0
  %328 = vmatprep.subr.mxu0 0.0
  %329 = vmatpush1.msra.mxu0 0.0
  %330 = vmatprep.subr.mxu0 0.0
  %331 = vmatpush1.msra.mxu0 0.0
  %332 = vmatprep.subr.mxu0 0.0
  %333 = vmatpush1.msra.mxu0 0.0
  %334 = vmatprep.subr.mxu0 0.0
  %335 = vmatpush1.msra.mxu0 0.0
  %336 = vmatprep.subr.mxu0 0.0
  %337 = vmatpush1.msra.mxu0 0.0
  %338 = vmatprep.subr.mxu0 0.0
  %339 = vmatpush1.msra.mxu0 0.0
  %340 = vmatprep.subr.mxu0 0.0
  %341 = vmatpush1.msra.mxu0 0.0
  %342 = vmatprep.subr.mxu0 0.0
  %343 = vmatpush1.msra.mxu0 0.0
  %344 = vmatprep.subr.mxu0 0.0
  %345 = vmatpush1.msra.mxu0 0.0
  %346 = vmatprep.subr.mxu0 0.0
  %347 = vmatpush1.msra.mxu0 0.0
  %348 = vmatprep.subr.mxu0 0.0
  %349 = vmatpush1.msra.mxu0 0.0
  %350 = vmatprep.subr.mxu0 0.0
  %351 = vmatpush1.msra.mxu0 0.0
  %352 = vmatprep.subr.mxu0 0.0
  %353 = vmatpush1.msra.mxu0 0.0
  %354 = vmatprep.subr.mxu0 0.0
  %355 = vmatpush1.msra.mxu0 0.0
  %356 = vmatprep.mubr.f32.mxu0 0.0
  %357 = vmatmul.mubr.f32.gmra.mrb[0].mxu0 %v193
  %v358 = vpop.f32.mrb[0].mxu0
  %v359 = vadd.f32 %v189, %v358
  %v360 = vpop.f32.mrb[0].mxu0
  %361 = vmatprep.mubr.f32.mxu0 0.0
  %362 = vmatmul.mubr.f32.gmra.mrb[0].mxu0 %v196
  %v363 = vpop.f32.mrb[0].mxu0
  %v364 = vadd.f32 %v189, %v363
  %v365 = vpop.f32.mrb[0].mxu0
  %366 = vmatprep.mubr.f32.mxu0 0.0
  %367 = vmatmul.mubr.f32.gmra.mrb[0].mxu0 %v199
  %v368 = vpop.f32.mrb[0].mxu0
  %v369 = vadd.f32 %v189, %v368
  %v370 = vpop.f32.mrb[0].mxu0
  %371 = vmatprep.mubr.f32.mxu0 0.0
  %372 = vmatmul.mubr.f32.gmra.mrb[0].mxu0 %v202
  %v373 = vpop.f32.mrb[0].mxu0
  %v374 = vadd.f32 %v189, %v373
  %v375 = vpop.f32.mrb[0].mxu0
  %376 = vmatprep.mubr.f32.mxu0 0.0
  %377 = vmatmul.mubr.f32.gmra.mrb[0].mxu0 %v205
  %v378 = vpop.f32.mrb[0].mxu0
  %v379 = vadd.f32 %v189, %v378
  %v380 = vpop.f32.mrb[0].mxu0
  %381 = vmatprep.mubr.f32.mxu0 0.0
  %382 = vmatmul.mubr.f32.gmra.mrb[0].mxu0 %v208
  %v383 = vpop.f32.mrb[0].mxu0
  %v384 = vadd.f32 %v189, %v383
  %v385 = vpop.f32.mrb[0].mxu0
  %386 = vmatprep.mubr.f32.mxu0 0.0
  %387 = vmatmul.mubr.f32.gmra.mrb[0].mxu0 %v211
  %v388 = vpop.f32.mrb[0].mxu0
  %v389 = vadd.f32 %v189, %v388
  %v390 = vpop.f32.mrb[0].mxu0
  %391 = vmatprep.mubr.f32.mxu0 0.0
  %392 = vmatmul.mubr.f32.gmra.mrb[0].mxu0 %v214
  %v393 = vpop.f32.mrb[0].mxu0
  %v394 = vadd.f32 %v189, %v393
  %v395 = vpop.f32.mrb[0].mxu0
  %396 = vmatprep.mubr.f32.mxu0 0.0
  %397 = vmatmul.mubr.f32.gmra.mrb[0].mxu0 %v217
  %v398 = vpop.f32.mrb[0].mxu0
  %v399 = vadd.f32 %v189, %v398
  %v400 = vpop.f32.mrb[0].mxu0
  %401 = vmatprep.mubr.f32.mxu0 0.0
  %402 = vmatmul.mubr.f32.gmra.mrb[0].mxu0 %v220
  %v403 = vpop.f32.mrb[0].mxu0
  %v404 = vadd.f32 %v189, %v403
  %v405 = vpop.f32.mrb[0].mxu0
  %406 = vmatprep.mubr.f32.mxu0 0.0
  %407 = vmatmul.mubr.f32.gmra.mrb[0].mxu0 %v223
  %v408 = vpop.f32.mrb[0].mxu0
  %v409 = vadd.f32 %v189, %v408
  %v410 = vpop.f32.mrb[0].mxu0
  %411 = vmatprep.mubr.f32.mxu0 0.0
  %412 = vmatmul.mubr.f32.gmra.mrb[0].mxu0 %v226
  %v413 = vpop.f32.mrb[0].mxu0
  %v414 = vadd.f32 %v189, %v413
  %v415 = vpop.f32.mrb[0].mxu0
  %416 = vmatprep.mubr.f32.mxu0 0.0
  %417 = vmatmul.mubr.f32.gmra.mrb[0].mxu0 %v229
  %v418 = vpop.f32.mrb[0].mxu0
  %v419 = vadd.f32 %v189, %v418
  %v420 = vpop.f32.mrb[0].mxu0
  %421 = vmatprep.mubr.f32.mxu0 0.0
  %422 = vmatmul.mubr.f32.gmra.mrb[0].mxu0 %v232
  %v423 = vpop.f32.mrb[0].mxu0
  %v424 = vadd.f32 %v189, %v423
  %v425 = vpop.f32.mrb[0].mxu0
  %426 = vmatprep.mubr.f32.mxu0 0.0
  %427 = vmatmul.mubr.f32.gmra.mrb[0].mxu0 %v235
  %v428 = vpop.f32.mrb[0].mxu0
  %v429 = vadd.f32 %v189, %v428
  %v430 = vpop.f32.mrb[0].mxu0
  %431 = vmatprep.mubr.f32.mxu0 0.0
  %432 = vmatmul.mubr.f32.gmra.mrb[0].mxu0 %v238
  %v433 = vpop.f32.mrb[0].mxu0
  %v434 = vadd.f32 %v189, %v433
  %v435 = vpop.f32.mrb[0].mxu0
  %436 = vmatprep.mubr.f32.mxu0 0.0
  %437 = vmatmul.mubr.f32.gmra.mrb[0].mxu0 %v241
  %v438 = vpop.f32.mrb[0].mxu0
  %v439 = vadd.f32 %v189, %v438
  %v440 = vpop.f32.mrb[0].mxu0
  %441 = vmatprep.mubr.f32.mxu0 0.0
  %442 = vmatmul.mubr.f32.gmra.mrb[0].mxu0 %v244
  %v443 = vpop.f32.mrb[0].mxu0
  %v444 = vadd.f32 %v189, %v443
  %v445 = vpop.f32.mrb[0].mxu0
  %446 = vmatprep.mubr.f32.mxu0 0.0
  %447 = vmatmul.mubr.f32.gmra.mrb[0].mxu0 %v247
  %v448 = vpop.f32.mrb[0].mxu0
  %v449 = vadd.f32 %v189, %v448
  %v450 = vpop.f32.mrb[0].mxu0
  %451 = vmatprep.mubr.f32.mxu0 0.0
  %452 = vmatmul.mubr.f32.gmra.mrb[0].mxu0 %v250
  %v453 = vpop.f32.mrb[0].mxu0
  %v454 = vadd.f32 %v189, %v453
  %v455 = vpop.f32.mrb[0].mxu0
  %456 = vmatprep.mubr.f32.mxu0 0.0
  %457 = vmatmul.mubr.f32.gmra.mrb[0].mxu0 %v253
  %v458 = vpop.f32.mrb[0].mxu0
  %v459 = vadd.f32 %v189, %v458
  %v460 = vpop.f32.mrb[0].mxu0
  %461 = vmatprep.mubr.f32.mxu0 0.0
  %462 = vmatmul.mubr.f32.gmra.mrb[0].mxu0 %v256
  %v463 = vpop.f32.mrb[0].mxu0
  %v464 = vadd.f32 %v189, %v463
  %v465 = vpop.f32.mrb[0].mxu0
  %466 = vmatprep.mubr.f32.mxu0 0.0
  %467 = vmatmul.mubr.f32.gmra.mrb[0].mxu0 %v259
  %v468 = vpop.f32.mrb[0].mxu0
  %v469 = vadd.f32 %v189, %v468
  %v470 = vpop.f32.mrb[0].mxu0
  %471 = vmatprep.mubr.f32.mxu0 0.0
  %472 = vmatmul.mubr.f32.gmra.mrb[0].mxu0 %v262
  %v473 = vpop.f32.mrb[0].mxu0
  %v474 = vadd.f32 %v189, %v473
  %v475 = vpop.f32.mrb[0].mxu0
  %476 = vmatprep.mubr.f32.mxu0 0.0
  %477 = vmatmul.mubr.f32.gmra.mrb[0].mxu0 %v265
  %v478 = vpop.f32.mrb[0].mxu0
  %v479 = vadd.f32 %v189, %v478
  %v480 = vpop.f32.mrb[0].mxu0
  %481 = vmatprep.mubr.f32.mxu0 0.0
  %482 = vmatmul.mubr.f32.gmra.mrb[0].mxu0 %v268
  %v483 = vpop.f32.mrb[0].mxu0
  %v484 = vadd.f32 %v189, %v483
  %v485 = vpop.f32.mrb[0].mxu0
  %486 = vmatprep.mubr.f32.mxu0 0.0
  %487 = vmatmul.mubr.f32.gmra.mrb[0].mxu0 %v271
  %v488 = vpop.f32.mrb[0].mxu0
  %v489 = vadd.f32 %v189, %v488
  %v490 = vpop.f32.mrb[0].mxu0
  %491 = vmatprep.mubr.f32.mxu0 0.0
  %492 = vmatmul.mubr.f32.gmra.mrb[0].mxu0 %v274
  %v493 = vpop.f32.mrb[0].mxu0
  %v494 = vadd.f32 %v189, %v493
  %v495 = vpop.f32.mrb[0].mxu0
  %496 = vmatprep.mubr.f32.mxu0 0.0
  %497 = vmatmul.mubr.f32.gmra.mrb[0].mxu0 %v277
  %v498 = vpop.f32.mrb[0].mxu0
  %v499 = vadd.f32 %v189, %v498
  %v500 = vpop.f32.mrb[0].mxu0
  %501 = vmatprep.mubr.f32.mxu0 0.0
  %502 = vmatmul.mubr.f32.gmra.mrb[0].mxu0 %v280
  %v503 = vpop.f32.mrb[0].mxu0
  %v504 = vadd.f32 %v189, %v503
  %v505 = vpop.f32.mrb[0].mxu0
  %506 = vmatprep.mubr.f32.mxu0 0.0
  %507 = vmatmul.mubr.f32.gmra.mrb[0].mxu0 %v283
  %v508 = vpop.f32.mrb[0].mxu0
  %v509 = vadd.f32 %v189, %v508
  %v510 = vpop.f32.mrb[0].mxu0
  %511 = vmatprep.mubr.f32.mxu0 0.0
  %512 = vmatmul.mubr.f32.gmra.mrb[0].mxu0 %v286
  %v513 = vpop.f32.mrb[0].mxu0
  %v514 = vadd.f32 %v189, %v513
  %v515 = vpop.f32.mrb[0].mxu0
  %516 = vdwg.mxu0
  %517 = vxpose.xlu0.c.b16.start [1/8] %v131, 128
  %518 = vxpose.xlu0.c.b16.cont [2/8] %v133, 128
  %519 = vxpose.xlu0.c.b16.cont [3/8] %v135, 128
  %520 = vxpose.xlu0.c.b16.cont [4/8] %v137, 128
  %521 = vxpose.xlu0.c.b16.cont [5/8] 0, 128
  %522 = vxpose.xlu0.c.b16.cont [6/8] 0, 128
  %523 = vxpose.xlu0.c.b16.cont [7/8] 0, 128
  %524 = vxpose.xlu0.c.b16.end [8/8] 0, 128
  %v525 = vpop.trf.xlu0
  %v526 = vpop.trf.xlu0
  %v527 = vpop.trf.xlu0
  %v528 = vpop.trf.xlu0
  %v529 = vpop.trf.xlu0
  %v530 = vpop.trf.xlu0
  %v531 = vpop.trf.xlu0
  %v532 = vpop.trf.xlu0
  %533 = vxpose.xlu0.c.b16.start [1/8] %v132, 128
  %534 = vxpose.xlu0.c.b16.cont [2/8] %v134, 128
  %535 = vxpose.xlu0.c.b16.cont [3/8] %v136, 128
  %536 = vxpose.xlu0.c.b16.cont [4/8] %v138, 128
  %537 = vxpose.xlu0.c.b16.cont [5/8] 0, 128
  %538 = vxpose.xlu0.c.b16.cont [6/8] 0, 128
  %539 = vxpose.xlu0.c.b16.cont [7/8] 0, 128
  %540 = vxpose.xlu0.c.b16.end [8/8] 0, 128
  %v541 = vpop.trf.xlu0
  %v542 = vpop.trf.xlu0
  %v543 = vpop.trf.xlu0
  %v544 = vpop.trf.xlu0
  %v545 = vpop.trf.xlu0
  %v546 = vpop.trf.xlu0
  %v547 = vpop.trf.xlu0
  %v548 = vpop.trf.xlu0
  %vm549 = vcmask 523264
  %v551 = vsel %vm549, %v525, 0
  %v554 = vsel %vm549, %v526, 0
  %v557 = vsel %vm549, %v527, 0
  %v560 = vsel %vm549, %v528, 0
  %v563 = vsel %vm549, %v529, 0
  %v566 = vsel %vm549, %v530, 0
  %v569 = vsel %vm549, %v531, 0
  %v572 = vsel %vm549, %v532, 0
  %v575 = vsel %vm549, %v541, 0
  %v578 = vsel %vm549, %v542, 0
  %v581 = vsel %vm549, %v543, 0
  %v584 = vsel %vm549, %v544, 0
  %v587 = vsel %vm549, %v545, 0
  %v590 = vsel %vm549, %v546, 0
  %v593 = vsel %vm549, %v547, 0
  %v596 = vsel %vm549, %v548, 0
  %598 = vmatprep.subr.bf16.mxu0 0
  %599 = vmatpush1.bf16.msra.mxu0 %v147
  %600 = vmatprep.subr.bf16.mxu0 0
  %601 = vmatpush1.bf16.msra.mxu0 %v148
  %602 = vmatprep.subr.bf16.mxu0 0
  %603 = vmatpush1.bf16.msra.mxu0 %v149
  %604 = vmatprep.subr.bf16.mxu0 0
  %605 = vmatpush1.bf16.msra.mxu0 %v150
  %606 = vmatprep.subr.bf16.mxu0 0
  %607 = vmatpush1.bf16.msra.mxu0 0
  %608 = vmatprep.subr.bf16.mxu0 0
  %609 = vmatpush1.bf16.msra.mxu0 0
  %610 = vmatprep.subr.bf16.mxu0 0
  %611 = vmatpush1.bf16.msra.mxu0 0
  %612 = vmatprep.subr.bf16.mxu0 0
  %613 = vmatpush1.bf16.msra.mxu0 0
  %614 = vmatprep.subr.bf16.mxu0 0
  %615 = vmatpush1.bf16.msra.mxu0 0
  %616 = vmatprep.subr.bf16.mxu0 0
  %617 = vmatpush1.bf16.msra.mxu0 0
  %618 = vmatprep.subr.bf16.mxu0 0
  %619 = vmatpush1.bf16.msra.mxu0 0
  %620 = vmatprep.subr.bf16.mxu0 0
  %621 = vmatpush1.bf16.msra.mxu0 0
  %622 = vmatprep.subr.bf16.mxu0 0
  %623 = vmatpush1.bf16.msra.mxu0 0
  %624 = vmatprep.subr.bf16.mxu0 0
  %625 = vmatpush1.bf16.msra.mxu0 0
  %626 = vmatprep.subr.bf16.mxu0 0
  %627 = vmatpush1.bf16.msra.mxu0 0
  %628 = vmatprep.subr.bf16.mxu0 0
  %629 = vmatpush1.bf16.msra.mxu0 0
  %630 = vmatprep.mubr.bf16.mxu0 0
  %631 = vmatmul.mubr.bf16.gmra.mrb[0].mxu0 %v551
  %v632 = vpop.f32.mrb[0].mxu0
  %v633 = vadd.f32 %v359, %v632
  %v634 = vpop.f32.mrb[0].mxu0
  %v635 = vpop.f32.mrb[0].mxu0
  %v636 = vadd.f32 %v364, %v635
  %v637 = vpop.f32.mrb[0].mxu0
  %638 = vmatprep.mubr.bf16.mxu0 0
  %639 = vmatmul.mubr.bf16.gmra.mrb[0].mxu0 %v554
  %v640 = vpop.f32.mrb[0].mxu0
  %v641 = vadd.f32 %v369, %v640
  %v642 = vpop.f32.mrb[0].mxu0
  %v643 = vpop.f32.mrb[0].mxu0
  %v644 = vadd.f32 %v374, %v643
  %v645 = vpop.f32.mrb[0].mxu0
  %646 = vmatprep.mubr.bf16.mxu0 0
  %647 = vmatmul.mubr.bf16.gmra.mrb[0].mxu0 %v557
  %v648 = vpop.f32.mrb[0].mxu0
  %v649 = vadd.f32 %v379, %v648
  %v650 = vpop.f32.mrb[0].mxu0
  %v651 = vpop.f32.mrb[0].mxu0
  %v652 = vadd.f32 %v384, %v651
  %v653 = vpop.f32.mrb[0].mxu0
  %654 = vmatprep.mubr.bf16.mxu0 0
  %655 = vmatmul.mubr.bf16.gmra.mrb[0].mxu0 %v560
  %v656 = vpop.f32.mrb[0].mxu0
  %v657 = vadd.f32 %v389, %v656
  %v658 = vpop.f32.mrb[0].mxu0
  %v659 = vpop.f32.mrb[0].mxu0
  %v660 = vadd.f32 %v394, %v659
  %v661 = vpop.f32.mrb[0].mxu0
  %662 = vmatprep.mubr.bf16.mxu0 0
  %663 = vmatmul.mubr.bf16.gmra.mrb[0].mxu0 %v563
  %v664 = vpop.f32.mrb[0].mxu0
  %v665 = vadd.f32 %v399, %v664
  %v666 = vpop.f32.mrb[0].mxu0
  %v667 = vpop.f32.mrb[0].mxu0
  %v668 = vadd.f32 %v404, %v667
  %v669 = vpop.f32.mrb[0].mxu0
  %670 = vmatprep.mubr.bf16.mxu0 0
  %671 = vmatmul.mubr.bf16.gmra.mrb[0].mxu0 %v566
  %v672 = vpop.f32.mrb[0].mxu0
  %v673 = vadd.f32 %v409, %v672
  %v674 = vpop.f32.mrb[0].mxu0
  %v675 = vpop.f32.mrb[0].mxu0
  %v676 = vadd.f32 %v414, %v675
  %v677 = vpop.f32.mrb[0].mxu0
  %678 = vmatprep.mubr.bf16.mxu0 0
  %679 = vmatmul.mubr.bf16.gmra.mrb[0].mxu0 %v569
  %v680 = vpop.f32.mrb[0].mxu0
  %v681 = vadd.f32 %v419, %v680
  %v682 = vpop.f32.mrb[0].mxu0
  %v683 = vpop.f32.mrb[0].mxu0
  %v684 = vadd.f32 %v424, %v683
  %v685 = vpop.f32.mrb[0].mxu0
  %686 = vmatprep.mubr.bf16.mxu0 0
  %687 = vmatmul.mubr.bf16.gmra.mrb[0].mxu0 %v572
  %v688 = vpop.f32.mrb[0].mxu0
  %v689 = vadd.f32 %v429, %v688
  %v690 = vpop.f32.mrb[0].mxu0
  %v691 = vpop.f32.mrb[0].mxu0
  %v692 = vadd.f32 %v434, %v691
  %v693 = vpop.f32.mrb[0].mxu0
  %694 = vmatprep.mubr.bf16.mxu0 0
  %695 = vmatmul.mubr.bf16.gmra.mrb[0].mxu0 %v575
  %v696 = vpop.f32.mrb[0].mxu0
  %v697 = vadd.f32 %v439, %v696
  %v698 = vpop.f32.mrb[0].mxu0
  %v699 = vpop.f32.mrb[0].mxu0
  %v700 = vadd.f32 %v444, %v699
  %v701 = vpop.f32.mrb[0].mxu0
  %702 = vmatprep.mubr.bf16.mxu0 0
  %703 = vmatmul.mubr.bf16.gmra.mrb[0].mxu0 %v578
  %v704 = vpop.f32.mrb[0].mxu0
  %v705 = vadd.f32 %v449, %v704
  %v706 = vpop.f32.mrb[0].mxu0
  %v707 = vpop.f32.mrb[0].mxu0
  %v708 = vadd.f32 %v454, %v707
  %v709 = vpop.f32.mrb[0].mxu0
  %710 = vmatprep.mubr.bf16.mxu0 0
  %711 = vmatmul.mubr.bf16.gmra.mrb[0].mxu0 %v581
  %v712 = vpop.f32.mrb[0].mxu0
  %v713 = vadd.f32 %v459, %v712
  %v714 = vpop.f32.mrb[0].mxu0
  %v715 = vpop.f32.mrb[0].mxu0
  %v716 = vadd.f32 %v464, %v715
  %v717 = vpop.f32.mrb[0].mxu0
  %718 = vmatprep.mubr.bf16.mxu0 0
  %719 = vmatmul.mubr.bf16.gmra.mrb[0].mxu0 %v584
  %v720 = vpop.f32.mrb[0].mxu0
  %v721 = vadd.f32 %v469, %v720
  %v722 = vpop.f32.mrb[0].mxu0
  %v723 = vpop.f32.mrb[0].mxu0
  %v724 = vadd.f32 %v474, %v723
  %v725 = vpop.f32.mrb[0].mxu0
  %726 = vmatprep.mubr.bf16.mxu0 0
  %727 = vmatmul.mubr.bf16.gmra.mrb[0].mxu0 %v587
  %v728 = vpop.f32.mrb[0].mxu0
  %v729 = vadd.f32 %v479, %v728
  %v730 = vpop.f32.mrb[0].mxu0
  %v731 = vpop.f32.mrb[0].mxu0
  %v732 = vadd.f32 %v484, %v731
  %v733 = vpop.f32.mrb[0].mxu0
  %734 = vmatprep.mubr.bf16.mxu0 0
  %735 = vmatmul.mubr.bf16.gmra.mrb[0].mxu0 %v590
  %v736 = vpop.f32.mrb[0].mxu0
  %v737 = vadd.f32 %v489, %v736
  %v738 = vpop.f32.mrb[0].mxu0
  %v739 = vpop.f32.mrb[0].mxu0
  %v740 = vadd.f32 %v494, %v739
  %v741 = vpop.f32.mrb[0].mxu0
  %742 = vmatprep.mubr.bf16.mxu0 0
  %743 = vmatmul.mubr.bf16.gmra.mrb[0].mxu0 %v593
  %v744 = vpop.f32.mrb[0].mxu0
  %v745 = vadd.f32 %v499, %v744
  %v746 = vpop.f32.mrb[0].mxu0
  %v747 = vpop.f32.mrb[0].mxu0
  %v748 = vadd.f32 %v504, %v747
  %v749 = vpop.f32.mrb[0].mxu0
  %750 = vmatprep.mubr.bf16.mxu0 0
  %751 = vmatmul.mubr.bf16.gmra.mrb[0].mxu0 %v596
  %v752 = vpop.f32.mrb[0].mxu0
  %v753 = vadd.f32 %v509, %v752
  %v754 = vpop.f32.mrb[0].mxu0
  %v755 = vpop.f32.mrb[0].mxu0
  %v756 = vadd.f32 %v514, %v755
  %v757 = vpop.f32.mrb[0].mxu0
  %758 = vdwg.mxu0
  %v759 = vmax.f32 %v633, 0.0
  %v760 = vmax.f32 %v636, 0.0
  %v761 = vmax.f32 %v641, 0.0
  %v762 = vmax.f32 %v644, 0.0
  %v763 = vmax.f32 %v649, 0.0
  %v764 = vmax.f32 %v652, 0.0
  %v765 = vmax.f32 %v657, 0.0
  %v766 = vmax.f32 %v660, 0.0
  %v767 = vmax.f32 %v665, 0.0
  %v768 = vmax.f32 %v668, 0.0
  %v769 = vmax.f32 %v673, 0.0
  %v770 = vmax.f32 %v676, 0.0
  %v771 = vmax.f32 %v681, 0.0
  %v772 = vmax.f32 %v684, 0.0
  %v773 = vmax.f32 %v689, 0.0
  %v774 = vmax.f32 %v692, 0.0
  %v775 = vmax.f32 %v697, 0.0
  %v776 = vmax.f32 %v700, 0.0
  %v777 = vmax.f32 %v705, 0.0
  %v778 = vmax.f32 %v708, 0.0
  %v779 = vmax.f32 %v713, 0.0
  %v780 = vmax.f32 %v716, 0.0
  %v781 = vmax.f32 %v721, 0.0
  %v782 = vmax.f32 %v724, 0.0
  %v783 = vmax.f32 %v729, 0.0
  %v784 = vmax.f32 %v732, 0.0
  %v785 = vmax.f32 %v737, 0.0
  %v786 = vmax.f32 %v740, 0.0
  %v787 = vmax.f32 %v745, 0.0
  %v788 = vmax.f32 %v748, 0.0
  %v789 = vmax.f32 %v753, 0.0
  %v790 = vmax.f32 %v756, 0.0
  %v791 = vpack.c.bf16 %v760, %v759
  %v792 = vpack.c.bf16 %v762, %v761
  %v793 = vpack.c.bf16 %v764, %v763
  %v794 = vpack.c.bf16 %v766, %v765
  %v795 = vpack.c.bf16 %v768, %v767
  %v796 = vpack.c.bf16 %v770, %v769
  %v797 = vpack.c.bf16 %v772, %v771
  %v798 = vpack.c.bf16 %v774, %v773
  %v799 = vpack.c.bf16 %v776, %v775
  %v800 = vpack.c.bf16 %v778, %v777
  %v801 = vpack.c.bf16 %v780, %v779
  %v802 = vpack.c.bf16 %v782, %v781
  %v803 = vpack.c.bf16 %v784, %v783
  %v804 = vpack.c.bf16 %v786, %v785
  %v805 = vpack.c.bf16 %v788, %v787
  %v806 = vpack.c.bf16 %v790, %v789
  %s807 = smul.u32 0, 64
  %v808 = vstv %s807
  %v809 = vadd.s32 %v59, %v808
  %v810 = vadd.s32 %v60, %v808
  %v811 = vadd.s32 %v61, %v808
  %v812 = vadd.s32 %v62, %v808
  %v813 = vadd.s32 %v63, %v808
  %v814 = vadd.s32 %v64, %v808
  %v815 = vadd.s32 %v65, %v808
  %v816 = vadd.s32 %v66, %v808
  %v817 = vlaneseq
  %v818 = vshrl.u32 %v817, 7
  %v819 = vsub.s32 1, %v818
  %v820 = vrot.slane %v57, %v819
  %v821 = vlaneseq
  %v822 = vshrl.u32 %v821, 7
  %v823 = vsub.s32 3, %v822
  %v824 = vrot.slane %v57, %v823
  %v825 = vlaneseq
  %v826 = vshrl.u32 %v825, 7
  %v827 = vsub.s32 1, %v826
  %v828 = vrot.slane %v820, %v827
  %v829 = vlaneseq
  %v830 = vshrl.u32 %v829, 7
  %v831 = vsub.s32 1, %v830
  %v832 = vrot.slane %v824, %v831
  %vm833 = vcmp.eq.s32.totalorder %v809, %v828
  %vm834 = vcmp.eq.s32.totalorder %v809, %v832
  %vm835 = vcmp.eq.s32.totalorder %v810, %v828
  %vm836 = vcmp.eq.s32.totalorder %v810, %v832
  %vm837 = vcmp.eq.s32.totalorder %v811, %v828
  %vm838 = vcmp.eq.s32.totalorder %v811, %v832
  %vm839 = vcmp.eq.s32.totalorder %v812, %v828
  %vm840 = vcmp.eq.s32.totalorder %v812, %v832
  %vm841 = vcmp.eq.s32.totalorder %v813, %v828
  %vm842 = vcmp.eq.s32.totalorder %v813, %v832
  %vm843 = vcmp.eq.s32.totalorder %v814, %v828
  %vm844 = vcmp.eq.s32.totalorder %v814, %v832
  %vm845 = vcmp.eq.s32.totalorder %v815, %v828
  %vm846 = vcmp.eq.s32.totalorder %v815, %v832
  %vm847 = vcmp.eq.s32.totalorder %v816, %v828
  %vm848 = vcmp.eq.s32.totalorder %v816, %v832
  %v849 = vsel %vm833, 1, 0
  %v850 = vsel %vm834, 1, 0
  %v851 = vsel %vm835, 1, 0
  %v852 = vsel %vm836, 1, 0
  %v853 = vsel %vm837, 1, 0
  %v854 = vsel %vm838, 1, 0
  %v855 = vsel %vm839, 1, 0
  %v856 = vsel %vm840, 1, 0
  %v857 = vsel %vm841, 1, 0
  %v858 = vsel %vm842, 1, 0
  %v859 = vsel %vm843, 1, 0
  %v860 = vsel %vm844, 1, 0
  %v861 = vsel %vm845, 1, 0
  %v862 = vsel %vm846, 1, 0
  %v863 = vsel %vm847, 1, 0
  %v864 = vsel %vm848, 1, 0
  %v865 = vcvt.s32.f32 %v849
  %v866 = vcvt.s32.f32 %v850
  %v867 = vcvt.s32.f32 %v851
  %v868 = vcvt.s32.f32 %v852
  %v869 = vcvt.s32.f32 %v853
  %v870 = vcvt.s32.f32 %v854
  %v871 = vcvt.s32.f32 %v855
  %v872 = vcvt.s32.f32 %v856
  %v873 = vcvt.s32.f32 %v857
  %v874 = vcvt.s32.f32 %v858
  %v875 = vcvt.s32.f32 %v859
  %v876 = vcvt.s32.f32 %v860
  %v877 = vcvt.s32.f32 %v861
  %v878 = vcvt.s32.f32 %v862
  %v879 = vcvt.s32.f32 %v863
  %v880 = vcvt.s32.f32 %v864
  %v881 = vpack.c.bf16 %v867, %v865
  %v882 = vpack.c.bf16 %v868, %v866
  %v883 = vpack.c.bf16 %v871, %v869
  %v884 = vpack.c.bf16 %v872, %v870
  %v885 = vpack.c.bf16 %v875, %v873
  %v886 = vpack.c.bf16 %v876, %v874
  %v887 = vpack.c.bf16 %v879, %v877
  %v888 = vpack.c.bf16 %v880, %v878
  %v889 = vld [vmem:[#allocation2] sm:$0xff]
  %v890 = vld [vmem:[#allocation2 + $0x8] sm:$0xff]
  %v891 = vld [vmem:[#allocation2 + $0x10] sm:$0xff]
  %v892 = vld [vmem:[#allocation2 + $0x18] sm:$0xff]
  %v893 = vld [vmem:[#allocation2 + $0x20] sm:$0xff]
  %v894 = vld [vmem:[#allocation2 + $0x28] sm:$0xff]
  %v895 = vld [vmem:[#allocation2 + $0x30] sm:$0xff]
  %v896 = vld [vmem:[#allocation2 + $0x38] sm:$0xff]
  %897 = vmatprep.subr.bf16.mxu0 0
  %898 = vmatpush1.bf16.msra.mxu0 %v791
  %899 = vmatprep.subr.bf16.mxu0 0
  %900 = vmatpush1.bf16.msra.mxu0 %v792
  %901 = vmatprep.subr.bf16.mxu0 0
  %902 = vmatpush1.bf16.msra.mxu0 %v793
  %903 = vmatprep.subr.bf16.mxu0 0
  %904 = vmatpush1.bf16.msra.mxu0 %v794
  %905 = vmatprep.subr.bf16.mxu0 0
  %906 = vmatpush1.bf16.msra.mxu0 %v795
  %907 = vmatprep.subr.bf16.mxu0 0
  %908 = vmatpush1.bf16.msra.mxu0 %v796
  %909 = vmatprep.subr.bf16.mxu0 0
  %910 = vmatpush1.bf16.msra.mxu0 %v797
  %911 = vmatprep.subr.bf16.mxu0 0
  %912 = vmatpush1.bf16.msra.mxu0 %v798
  %913 = vmatprep.subr.bf16.mxu0 0
  %914 = vmatpush1.bf16.msra.mxu0 %v799
  %915 = vmatprep.subr.bf16.mxu0 0
  %916 = vmatpush1.bf16.msra.mxu0 %v800
  %917 = vmatprep.subr.bf16.mxu0 0
  %918 = vmatpush1.bf16.msra.mxu0 %v801
  %919 = vmatprep.subr.bf16.mxu0 0
  %920 = vmatpush1.bf16.msra.mxu0 %v802
  %921 = vmatprep.subr.bf16.mxu0 0
  %922 = vmatpush1.bf16.msra.mxu0 %v803
  %923 = vmatprep.subr.bf16.mxu0 0
  %924 = vmatpush1.bf16.msra.mxu0 %v804
  %925 = vmatprep.subr.bf16.mxu0 0
  %926 = vmatpush1.bf16.msra.mxu0 %v805
  %927 = vmatprep.subr.bf16.mxu0 0
  %928 = vmatpush1.bf16.msra.mxu0 %v806
  %929 = vmatprep.mubr.bf16.mxu0 %v882
  %930 = vmatmul.mubr.bf16.gmra.mrb[0].mxu0 %v881
  %v931 = vpop.f32.mrb[0].mxu0
  %v932 = vadd.f32 0.0, %v931
  %v933 = vpop.f32.mrb[0].mxu0
  %v934 = vpop.f32.mrb[0].mxu0
  %v935 = vadd.f32 0.0, %v934
  %v936 = vpop.f32.mrb[0].mxu0
  %937 = vmatprep.mubr.bf16.mxu0 %v884
  %938 = vmatmul.mubr.bf16.gmra.mrb[0].mxu0 %v883
  %v939 = vpop.f32.mrb[0].mxu0
  %v940 = vadd.f32 0.0, %v939
  %v941 = vpop.f32.mrb[0].mxu0
  %v942 = vpop.f32.mrb[0].mxu0
  %v943 = vadd.f32 0.0, %v942
  %v944 = vpop.f32.mrb[0].mxu0
  %945 = vmatprep.mubr.bf16.mxu0 %v886
  %946 = vmatmul.mubr.bf16.gmra.mrb[0].mxu0 %v885
  %v947 = vpop.f32.mrb[0].mxu0
  %v948 = vadd.f32 0.0, %v947
  %v949 = vpop.f32.mrb[0].mxu0
  %v950 = vpop.f32.mrb[0].mxu0
  %v951 = vadd.f32 0.0, %v950
  %v952 = vpop.f32.mrb[0].mxu0
  %953 = vmatprep.mubr.bf16.mxu0 %v888
  %954 = vmatmul.mubr.bf16.gmra.mrb[0].mxu0 %v887
  %v955 = vpop.f32.mrb[0].mxu0
  %v956 = vadd.f32 0.0, %v955
  %v957 = vpop.f32.mrb[0].mxu0
  %v958 = vpop.f32.mrb[0].mxu0
  %v959 = vadd.f32 0.0, %v958
  %v960 = vpop.f32.mrb[0].mxu0
  %961 = vdwg.mxu0
  %v962 = vadd.f32 %v889, %v932
  %v963 = vadd.f32 %v890, %v935
  %v964 = vadd.f32 %v891, %v940
  %v965 = vadd.f32 %v892, %v943
  %v966 = vadd.f32 %v893, %v948
  %v967 = vadd.f32 %v894, %v951
  %v968 = vadd.f32 %v895, %v956
  %v969 = vadd.f32 %v896, %v959
  %vm970 = vcmask 261120
  %971 = vst.msk [vmem:[#allocation2] sm:$0xff] %vm970, %v962
  %972 = vst.msk [vmem:[#allocation2 + $0x8] sm:$0xff] %vm970, %v963
  %973 = vst.msk [vmem:[#allocation2 + $0x10] sm:$0xff] %vm970, %v964
  %974 = vst.msk [vmem:[#allocation2 + $0x18] sm:$0xff] %vm970, %v965
  %975 = vst.msk [vmem:[#allocation2 + $0x20] sm:$0xff] %vm970, %v966
  %976 = vst.msk [vmem:[#allocation2 + $0x28] sm:$0xff] %vm970, %v967
  %977 = vst.msk [vmem:[#allocation2 + $0x30] sm:$0xff] %vm970, %v968
  %978 = vst.msk [vmem:[#allocation2 + $0x38] sm:$0xff] %vm970, %v969
  // Predicated region
  $region54: #{tpu_custom_call.1} parent=0 // pred_check
    %p979 = pneg %p44
  $region55: #{tpu_custom_call.1} parent=0 // pred_check_branch
    %981 = sbr.rel (%p979) target = $region57
  $region56: #{tpu_custom_call.1} parent=0 // pred_region
    %v982 = vld [vmem:[%s3] sm:$0xff]
    %v983 = vld [vmem:[%s3 + $0x8] sm:$0xff]
    %v984 = vld [vmem:[%s3 + $0x10] sm:$0xff]
    %v985 = vld [vmem:[%s3 + $0x18] sm:$0xff]
    %v986 = vld [vmem:[%s3 + $0x20] sm:$0xff]
    %v987 = vld [vmem:[%s3 + $0x28] sm:$0xff]
    %v988 = vld [vmem:[%s3 + $0x30] sm:$0xff]
    %v989 = vld [vmem:[%s3 + $0x38] sm:$0xff]
    %v990 = vld [vmem:[#allocation3] sm:$0x1]
    %s991 = vtos %v990
    %s992 = sadd.f32 %s991, 1.0
    %v993 = vstv %s992
    %v994 = vmul.f32 %v993, %v982
    %v995 = vmul.f32 %v993, %v983
    %v996 = vmul.f32 %v993, %v984
    %v997 = vmul.f32 %v993, %v985
    %v998 = vmul.f32 %v993, %v986
    %v999 = vmul.f32 %v993, %v987
    %v1000 = vmul.f32 %v993, %v988
    %v1001 = vmul.f32 %v993, %v989
    %v1002 = vld [vmem:[#allocation2] sm:$0xff]
    %v1003 = vld [vmem:[#allocation2 + $0x8] sm:$0xff]
    %v1004 = vld [vmem:[#allocation2 + $0x10] sm:$0xff]
    %v1005 = vld [vmem:[#allocation2 + $0x18] sm:$0xff]
    %v1006 = vld [vmem:[#allocation2 + $0x20] sm:$0xff]
    %v1007 = vld [vmem:[#allocation2 + $0x28] sm:$0xff]
    %v1008 = vld [vmem:[#allocation2 + $0x30] sm:$0xff]
    %v1009 = vld [vmem:[#allocation2 + $0x38] sm:$0xff]
    %v1010 = vadd.f32 %v994, %v1002
    %v1011 = vadd.f32 %v995, %v1003
    %v1012 = vadd.f32 %v996, %v1004
    %v1013 = vadd.f32 %v997, %v1005
    %v1014 = vadd.f32 %v998, %v1006
    %v1015 = vadd.f32 %v999, %v1007
    %v1016 = vadd.f32 %v1000, %v1008
    %v1017 = vadd.f32 %v1001, %v1009
    %v1018 = vpack.c.bf16 %v1011, %v1010
    %v1019 = vpack.c.bf16 %v1013, %v1012
    %v1020 = vpack.c.bf16 %v1015, %v1014
    %v1021 = vpack.c.bf16 %v1017, %v1016
    %v1022 = vld [vmem:[%s6] sm:$0xf]
    %v1023 = vld [vmem:[%s6 + $0x4] sm:$0xf]
    %v1024 = vld [vmem:[%s6 + $0x8] sm:$0xf]
    %v1025 = vld [vmem:[%s6 + $0xc] sm:$0xf]
    %v1026 = vld [vmem:[%s7] sm:$0x1]
    %v1028 = vlaneseq
    %v1029 = vshrl.u32 %v1028, 7
    %v1030 = vsub.s32 0, %v1029
    %v1031 = vrot.slane %v1026, %v1030
    %v1037 = vunpack.c.l.b16 %v1022
    %v1038 = vunpack.c.l.b16 %v1023
    %v1039 = vunpack.c.l.b16 %v1024
    %v1040 = vunpack.c.l.b16 %v1025
    %v1041 = vpack.c.b16 %v1038, %v1037
    %v1042 = vpack.c.b16 %v1040, %v1039
    %v1046 = vsel %vm970, %v1018, 0
    %v1049 = vsel %vm970, %v1019, 0
    %v1052 = vsel %vm970, %v1020, 0
    %v1055 = vsel %vm970, %v1021, 0
    %1057 = vmatprep.subr.bf16.mxu0 0
    %1058 = vmatpush1.bf16.msra.mxu0 %v1041
    %1059 = vmatprep.subr.bf16.mxu0 0
    %1060 = vmatpush1.bf16.msra.mxu0 %v1042
    %1061 = vmatprep.subr.bf16.mxu0 0
    %1062 = vmatpush1.bf16.msra.mxu0 0
    %1063 = vmatprep.subr.bf16.mxu0 0
    %1064 = vmatpush1.bf16.msra.mxu0 0
    %1065 = vmatprep.subr.bf16.mxu0 0
    %1066 = vmatpush1.bf16.msra.mxu0 0
    %1067 = vmatprep.subr.bf16.mxu0 0
    %1068 = vmatpush1.bf16.msra.mxu0 0
    %1069 = vmatprep.subr.bf16.mxu0 0
    %1070 = vmatpush1.bf16.msra.mxu0 0
    %1071 = vmatprep.subr.bf16.mxu0 0
    %1072 = vmatpush1.bf16.msra.mxu0 0
    %1073 = vmatprep.subr.bf16.mxu0 0
    %1074 = vmatpush1.bf16.msra.mxu0 0
    %1075 = vmatprep.subr.bf16.mxu0 0
    %1076 = vmatpush1.bf16.msra.mxu0 0
    %1077 = vmatprep.subr.bf16.mxu0 0
    %1078 = vmatpush1.bf16.msra.mxu0 0
    %1079 = vmatprep.subr.bf16.mxu0 0
    %1080 = vmatpush1.bf16.msra.mxu0 0
    %1081 = vmatprep.subr.bf16.mxu0 0
    %1082 = vmatpush1.bf16.msra.mxu0 0
    %1083 = vmatprep.subr.bf16.mxu0 0
    %1084 = vmatpush1.bf16.msra.mxu0 0
    %1085 = vmatprep.subr.bf16.mxu0 0
    %1086 = vmatpush1.bf16.msra.mxu0 0
    %1087 = vmatprep.subr.bf16.mxu0 0
    %1088 = vmatpush1.bf16.msra.mxu0 0
    %1089 = vmatprep.mubr.bf16.mxu0 0
    %1090 = vmatmul.mubr.bf16.gmra.mrb[0].mxu0 %v1046
    %v1091 = vpop.f32.mrb[0].mxu0
    %v1092 = vadd.f32 %v1031, %v1091
    %v1093 = vpop.f32.mrb[0].mxu0
    %v1094 = vpop.f32.mrb[0].mxu0
    %v1095 = vadd.f32 %v1031, %v1094
    %v1096 = vpop.f32.mrb[0].mxu0
    %1097 = vmatprep.mubr.bf16.mxu0 0
    %1098 = vmatmul.mubr.bf16.gmra.mrb[0].mxu0 %v1049
    %v1099 = vpop.f32.mrb[0].mxu0
    %v1100 = vadd.f32 %v1031, %v1099
    %v1101 = vpop.f32.mrb[0].mxu0
    %v1102 = vpop.f32.mrb[0].mxu0
    %v1103 = vadd.f32 %v1031, %v1102
    %v1104 = vpop.f32.mrb[0].mxu0
    %1105 = vmatprep.mubr.bf16.mxu0 0
    %1106 = vmatmul.mubr.bf16.gmra.mrb[0].mxu0 %v1052
    %v1107 = vpop.f32.mrb[0].mxu0
    %v1108 = vadd.f32 %v1031, %v1107
    %v1109 = vpop.f32.mrb[0].mxu0
    %v1110 = vpop.f32.mrb[0].mxu0
    %v1111 = vadd.f32 %v1031, %v1110
    %v1112 = vpop.f32.mrb[0].mxu0
    %1113 = vmatprep.mubr.bf16.mxu0 0
    %1114 = vmatmul.mubr.bf16.gmra.mrb[0].mxu0 %v1055
    %v1115 = vpop.f32.mrb[0].mxu0
    %v1116 = vadd.f32 %v1031, %v1115
    %v1117 = vpop.f32.mrb[0].mxu0
    %v1118 = vpop.f32.mrb[0].mxu0
    %v1119 = vadd.f32 %v1031, %v1118
    %v1120 = vpop.f32.mrb[0].mxu0
    %1121 = vdwg.mxu0
    %v1122 = vld [vmem:[%s8] sm:$0x1]
    %v1124 = vlaneseq
    %v1125 = vshrl.u32 %v1124, 7
    %v1126 = vsub.s32 0, %v1125
    %v1127 = vrot.slane %v1122, %v1126
    %v1129 = vmul.f32 %v1092, %v1127
    %v1130 = vmul.f32 %v1095, %v1127
    %v1131 = vmul.f32 %v1100, %v1127
    %v1132 = vmul.f32 %v1103, %v1127
    %v1133 = vmul.f32 %v1108, %v1127
    %v1134 = vmul.f32 %v1111, %v1127
    %v1135 = vmul.f32 %v1116, %v1127
    %v1136 = vmul.f32 %v1119, %v1127
    %v1137 = vld [vmem:[%s9] sm:$0x1]
    %v1139 = vlaneseq
    %v1140 = vshrl.u32 %v1139, 7
    %v1141 = vsub.s32 0, %v1140
    %v1142 = vrot.slane %v1137, %v1141
    %v1144 = vadd.f32 %v1129, %v1142
    %v1145 = vadd.f32 %v1130, %v1142
    %v1146 = vadd.f32 %v1131, %v1142
    %v1147 = vadd.f32 %v1132, %v1142
    %v1148 = vadd.f32 %v1133, %v1142
    %v1149 = vadd.f32 %v1134, %v1142
    %v1150 = vadd.f32 %v1135, %v1142
    %v1151 = vadd.f32 %v1136, %v1142
    %v1152 = vmax.f32 %v1144, 0.0
    %v1153 = vmax.f32 %v1145, 0.0
    %v1154 = vmax.f32 %v1146, 0.0
    %v1155 = vmax.f32 %v1147, 0.0
    %v1156 = vmax.f32 %v1148, 0.0
    %v1157 = vmax.f32 %v1149, 0.0
    %v1158 = vmax.f32 %v1150, 0.0
    %v1159 = vmax.f32 %v1151, 0.0
    %v1160 = vpack.c.bf16 %v1153, %v1152
    %v1161 = vpack.c.bf16 %v1155, %v1154
    %v1162 = vpack.c.bf16 %v1157, %v1156
    %v1163 = vpack.c.bf16 %v1159, %v1158
    %v1164 = vld [vmem:[%s10] sm:$0xf]
    %v1165 = vld [vmem:[%s10 + $0x4] sm:$0xf]
    %v1166 = vld [vmem:[%s10 + $0x8] sm:$0xf]
    %v1167 = vld [vmem:[%s10 + $0xc] sm:$0xf]
    %v1168 = vld [vmem:[%s10 + $0x10] sm:$0xf]
    %v1169 = vld [vmem:[%s10 + $0x14] sm:$0xf]
    %v1170 = vld [vmem:[%s10 + $0x18] sm:$0xf]
    %v1171 = vld [vmem:[%s10 + $0x1c] sm:$0xf]
    %v1172 = vld [vmem:[%s11] sm:$0x1]
    %v1174 = vlaneseq
    %v1175 = vshrl.u32 %v1174, 7
    %v1176 = vsub.s32 0, %v1175
    %v1177 = vrot.slane %v1172, %v1176
    %v1187 = vunpack.c.l.b16 %v1164
    %v1188 = vunpack.c.l.b16 %v1165
    %v1189 = vunpack.c.l.b16 %v1166
    %v1190 = vunpack.c.l.b16 %v1167
    %v1191 = vunpack.c.l.b16 %v1168
    %v1192 = vunpack.c.l.b16 %v1169
    %v1193 = vunpack.c.l.b16 %v1170
    %v1194 = vunpack.c.l.b16 %v1171
    %v1195 = vpack.c.b16 %v1188, %v1187
    %v1196 = vpack.c.b16 %v1190, %v1189
    %v1197 = vpack.c.b16 %v1192, %v1191
    %v1198 = vpack.c.b16 %v1194, %v1193
    %v1204 = vsel %vm549, %v1160, 0
    %v1207 = vsel %vm549, %v1161, 0
    %v1210 = vsel %vm549, %v1162, 0
    %v1213 = vsel %vm549, %v1163, 0
    %1215 = vmatprep.subr.bf16.mxu0 0
    %1216 = vmatpush1.bf16.msra.mxu0 %v1195
    %1217 = vmatprep.subr.bf16.mxu0 0
    %1218 = vmatpush1.bf16.msra.mxu0 %v1196
    %1219 = vmatprep.subr.bf16.mxu0 0
    %1220 = vmatpush1.bf16.msra.mxu0 %v1197
    %1221 = vmatprep.subr.bf16.mxu0 0
    %1222 = vmatpush1.bf16.msra.mxu0 %v1198
    %1223 = vmatprep.subr.bf16.mxu0 0
    %1224 = vmatpush1.bf16.msra.mxu0 0
    %1225 = vmatprep.subr.bf16.mxu0 0
    %1226 = vmatpush1.bf16.msra.mxu0 0
    %1227 = vmatprep.subr.bf16.mxu0 0
    %1228 = vmatpush1.bf16.msra.mxu0 0
    %1229 = vmatprep.subr.bf16.mxu0 0
    %1230 = vmatpush1.bf16.msra.mxu0 0
    %1231 = vmatprep.subr.bf16.mxu0 0
    %1232 = vmatpush1.bf16.msra.mxu0 0
    %1233 = vmatprep.subr.bf16.mxu0 0
    %1234 = vmatpush1.bf16.msra.mxu0 0
    %1235 = vmatprep.subr.bf16.mxu0 0
    %1236 = vmatpush1.bf16.msra.mxu0 0
    %1237 = vmatprep.subr.bf16.mxu0 0
    %1238 = vmatpush1.bf16.msra.mxu0 0
    %1239 = vmatprep.subr.bf16.mxu0 0
    %1240 = vmatpush1.bf16.msra.mxu0 0
    %1241 = vmatprep.subr.bf16.mxu0 0
    %1242 = vmatpush1.bf16.msra.mxu0 0
    %1243 = vmatprep.subr.bf16.mxu0 0
    %1244 = vmatpush1.bf16.msra.mxu0 0
    %1245 = vmatprep.subr.bf16.mxu0 0
    %1246 = vmatpush1.bf16.msra.mxu0 0
    %1247 = vmatprep.mubr.bf16.mxu0 0
    %1248 = vmatmul.mubr.bf16.gmra.mrb[0].mxu0 %v1204
    %v1249 = vpop.f32.mrb[0].mxu0
    %v1250 = vadd.f32 %v1177, %v1249
    %v1251 = vpop.f32.mrb[0].mxu0
    %v1252 = vpop.f32.mrb[0].mxu0
    %v1253 = vadd.f32 %v1177, %v1252
    %v1254 = vpop.f32.mrb[0].mxu0
    %1255 = vmatprep.mubr.bf16.mxu0 0
    %1256 = vmatmul.mubr.bf16.gmra.mrb[0].mxu0 %v1207
    %v1257 = vpop.f32.mrb[0].mxu0
    %v1258 = vadd.f32 %v1177, %v1257
    %v1259 = vpop.f32.mrb[0].mxu0
    %v1260 = vpop.f32.mrb[0].mxu0
    %v1261 = vadd.f32 %v1177, %v1260
    %v1262 = vpop.f32.mrb[0].mxu0
    %1263 = vmatprep.mubr.bf16.mxu0 0
    %1264 = vmatmul.mubr.bf16.gmra.mrb[0].mxu0 %v1210
    %v1265 = vpop.f32.mrb[0].mxu0
    %v1266 = vadd.f32 %v1177, %v1265
    %v1267 = vpop.f32.mrb[0].mxu0
    %v1268 = vpop.f32.mrb[0].mxu0
    %v1269 = vadd.f32 %v1177, %v1268
    %v1270 = vpop.f32.mrb[0].mxu0
    %1271 = vmatprep.mubr.bf16.mxu0 0
    %1272 = vmatmul.mubr.bf16.gmra.mrb[0].mxu0 %v1213
    %v1273 = vpop.f32.mrb[0].mxu0
    %v1274 = vadd.f32 %v1177, %v1273
    %v1275 = vpop.f32.mrb[0].mxu0
    %v1276 = vpop.f32.mrb[0].mxu0
    %v1277 = vadd.f32 %v1177, %v1276
    %v1278 = vpop.f32.mrb[0].mxu0
    %1279 = vdwg.mxu0
    %1280 = vst.msk [vmem:[%s12] sm:$0xff] %vm970, %v1250
    %1281 = vst.msk [vmem:[%s12 + $0x8] sm:$0xff] %vm970, %v1253
    %1282 = vst.msk [vmem:[%s12 + $0x10] sm:$0xff] %vm970, %v1258
    %1283 = vst.msk [vmem:[%s12 + $0x18] sm:$0xff] %vm970, %v1261
    %1284 = vst.msk [vmem:[%s12 + $0x20] sm:$0xff] %vm970, %v1266
    %1285 = vst.msk [vmem:[%s12 + $0x28] sm:$0xff] %vm970, %v1269
    %1286 = vst.msk [vmem:[%s12 + $0x30] sm:$0xff] %vm970, %v1274
    %1287 = vst.msk [vmem:[%s12 + $0x38] sm:$0xff] %vm970, %v1277
  $region57: #{tpu_custom_call.1} parent=0 // pred_fallthru
    _
  // Predicated region
  $region58: #{tpu_custom_call.1} parent=0 // pred_check
    _
  $region59: #{tpu_custom_call.1} parent=0 // pred_check_branch
    %1289 = sbr.rel (0) target = $region61
  $region60: #{tpu_custom_call.1} parent=0 // pred_region
    _
  $region61: #{tpu_custom_call.1} parent=0 // pred_fallthru
    _
  // Predicated region
  $region62: #{tpu_custom_call.1} parent=0 // pred_check
    _
  $region63: #{tpu_custom_call.1} parent=0 // pred_check_branch
    %1291 = sbr.rel (0) target = $region65
  $region64: #{tpu_custom_call.1} parent=0 // pred_region
    _
  $region65: #{tpu_custom_call.1} parent=0 // pred_fallthru
    _

</llo_original>
